<compile_context>
chip_gen: v7x
topology: tpu7x:2x2x1
jax: 0.10.0
libtpu: 0.0.40
codegen_flags: <defaults>
</compile_context>

<pallas_src>
import numpy as np
import jax
import jax.numpy as jnp
from jax.experimental import pallas as pl
from jax.experimental.pallas import tpu as pltpu


# ----------------------------- Pallas kernel ---------------------------------

def _make_wmsa_kernel(n_heads, head_dim, npix, w_blk, cout_pad, masked):
    H, D, NP, W = n_heads, head_dim, npix, w_blk
    C = H * D
    NT = W * NP          # tokens per grid step

    def kernel(*refs):
        if masked:
            (x_ref, wqkv_ref, bqkv_ref, bias_ref, mask_ref,
             wout_ref, bout_ref, o_ref) = refs
        else:
            (x_ref, wqkv_ref, bqkv_ref, bias_ref,
             wout_ref, bout_ref, o_ref) = refs
            mask_ref = None

        # ---- QKV projection: one lane-dense matmul (full MXU N-width = 3C) ----
        xt = x_ref[0].reshape(NT, C)                                  # bf16 [NT, C]
        qkv = jnp.dot(xt, wqkv_ref[...],
                      preferred_element_type=jnp.float32)             # [NT, 3C] f32
        qkv = (qkv + bqkv_ref[...]).astype(jnp.bfloat16)              # scale folded in Q

        # ---- split heads: lanes (3H*D) -> leading batch dim --------------------
        qkv = qkv.reshape(NT, 3 * H, D)
        qkv = jnp.swapaxes(qkv, 0, 1)                                 # [3H, NT, D]
        q = qkv[:H].reshape(H * W, NP, D)
        k = qkv[H:2 * H].reshape(H * W, NP, D)
        v = qkv[2 * H:].reshape(H * W, NP, D)

        # ---- attention, batched over (head, window) -----------------------------
        sim = jnp.einsum('bid,bjd->bij', q, k,
                         preferred_element_type=jnp.float32)          # [H*W, NP, NP]
        sim = sim.reshape(H, W, NP, NP) + bias_ref[...][:, None]      # rel-pos bias / head
        if masked:
            sim = sim + mask_ref[...].astype(jnp.float32)[None]       # shift mask / window
        sim = sim - jnp.max(sim, axis=-1, keepdims=True)
        p = jnp.exp(sim)
        p = p * pl.reciprocal(jnp.sum(p, axis=-1, keepdims=True), approx=True)
        p = p.reshape(H * W, NP, NP).astype(jnp.bfloat16)

        o = jnp.einsum('bij,bjd->bid', p, v,
                       preferred_element_type=jnp.float32)            # [H*W, NP, D]

        # ---- merge heads back into lanes, one lane-dense output matmul ---------
        o = o.astype(jnp.bfloat16).reshape(H, NT, D)
        o = jnp.swapaxes(o, 0, 1).reshape(NT, C)                      # [NT, (h d)]
        y = jnp.dot(o, wout_ref[...],
                    preferred_element_type=jnp.float32) + bout_ref[...]
        o_ref[0] = y.reshape(W, NP, cout_pad).astype(o_ref.dtype)

    return kernel


# ----------------------------- JAX glue ---------------------------------------

def relative_embedding(rel_pos_params, p):
    # rel_pos_params: [n_heads, 2p-1, 2p-1]   (same layout as the torch module after
    # its .view(...).transpose(1,2).transpose(0,1))
    cord = np.array([[i, j] for i in range(p) for j in range(p)])     # [NP, 2]
    relation = cord[:, None, :] - cord[None, :, :] + p - 1            # [NP, NP, 2]
    return rel_pos_params[:, relation[..., 0], relation[..., 1]]      # [n_heads, NP, NP]


def generate_mask(hw, ww, p, shift):
    m = np.zeros((hw, ww, p, p, p, p), dtype=bool)
    s = p - shift
    m[-1, :, :s, :, s:, :] = True
    m[-1, :, s:, :, :s, :] = True
    m[:, -1, :, :s, :, s:] = True
    m[:, -1, :, s:, :, :s] = True
    return jnp.asarray(m.reshape(hw * ww, p * p, p * p))              # [NW, NP, NP]


def _round_up(x, m):
    return (x + m - 1) // m * m


def _pick_window_block(nw, npix, batch, target_tokens=1024, min_steps=4):
    # Largest divisor of nw such that w_blk*NP <= target_tokens (amortize the ~0.35us
    # per-step overhead, tall M for the MXU) while keeping the grid at >= min_steps
    # steps so the 2 TensorCores on v7x both get work.
    best = 1
    for w in range(1, nw + 1):
        if nw % w != 0 or w * npix > target_tokens:
            continue
        if batch * (nw // w) >= min_steps or w == 1:
            best = w
    return best


def wmsa_forward(x, params, *, window_size, head_dim, attn_type, window_block=None):
    B, H, W, C = x.shape
    p = window_size
    n_heads = C // head_dim
    Cout = params['w_out'].shape[1]
    scale = head_dim ** (-0.5)
    shift = p // 2
    masked = attn_type != 'W'
    f32 = jnp.float32

    if masked:
        x = jnp.roll(x, shift=(-shift, -shift), axis=(1, 2))

    hw, ww = H // p, W // p
    nw, npix = hw * ww, p * p
    xw = (x.reshape(B, hw, p, ww, p, C)
           .transpose(0, 1, 3, 2, 4, 5)
           .reshape(B, nw, npix, C)).astype(jnp.bfloat16)             # bf16 stream

    if window_block is None:
        window_block = _pick_window_block(nw, npix, B)
    assert nw % window_block == 0
    w_blk = window_block

    # ---- parameter prep (cheap one-time transforms, fused by XLA) ----
    # Fold the 1/sqrt(head_dim) scale into the Q columns of the qkv projection.
    col_scale = jnp.concatenate([jnp.full((C,), scale, f32), jnp.ones((2 * C,), f32)])
    w_qkv = (params['w_qkv'].astype(f32) * col_scale[None, :]).astype(jnp.bfloat16)  # [C, 3C]
    b_qkv = params['b_qkv'].astype(f32) * col_scale[None, :]                          # [1, 3C] f32

    # Pad output channels to a multiple of 128 so the writeback is lane-dense
    # (unmasked vst); the wrapper slices the padding off afterwards.
    cout_pad = _round_up(Cout, 128)
    w_out = params['w_out'].astype(jnp.bfloat16)                                      # [C, Cout]
    b_out = params['b_out'].astype(f32)                                               # [1, Cout]
    if cout_pad != Cout:
        w_out = jnp.pad(w_out, ((0, 0), (0, cout_pad - Cout)))
        b_out = jnp.pad(b_out, ((0, 0), (0, cout_pad - Cout)))

    bias = relative_embedding(params['rel_pos'], p).astype(f32)                       # [H, NP, NP]

    # NOTE: constant-index weight inputs below could additionally get
    # pipeline_mode=pl.Buffered(1) to drop their second VMEM buffer on v7x; in bf16
    # they are already small so it is left at the default for portability.
    inputs = [xw, w_qkv, b_qkv, bias]
    in_specs = [
        pl.BlockSpec((1, w_blk, npix, C), lambda b, w: (b, w, 0, 0)),
        pl.BlockSpec((C, 3 * C), lambda b, w: (0, 0)),
        pl.BlockSpec((1, 3 * C), lambda b, w: (0, 0)),
        pl.BlockSpec((n_heads, npix, npix), lambda b, w: (0, 0, 0)),
    ]
    if masked:
        # Additive shift mask, stored in bf16 (halves the mask DMA stream).
        mask_add = jnp.where(generate_mask(hw, ww, p, shift),
                             -1e9, 0.0).astype(jnp.bfloat16)                          # [nw, NP, NP]
        inputs.append(mask_add)
        in_specs.append(pl.BlockSpec((w_blk, npix, npix), lambda b, w: (w, 0, 0)))
    inputs += [w_out, b_out]
    in_specs += [
        pl.BlockSpec((C, cout_pad), lambda b, w: (0, 0)),
        pl.BlockSpec((1, cout_pad), lambda b, w: (0, 0)),
    ]

    kernel = _make_wmsa_kernel(n_heads, head_dim, npix, w_blk, cout_pad, masked)

    out = pl.pallas_call(
        kernel,
        out_shape=jax.ShapeDtypeStruct((B, nw, npix, cout_pad), jnp.float32),
        grid_spec=pltpu.PrefetchScalarGridSpec(
            num_scalar_prefetch=0,
            grid=(B, nw // w_blk),
            in_specs=in_specs,
            out_specs=pl.BlockSpec((1, w_blk, npix, cout_pad), lambda b, w: (b, w, 0, 0)),
        ),
        compiler_params=pltpu.CompilerParams(
            dimension_semantics=("parallel", "parallel"),
            # bf16 streaming keeps per-step footprint small; 64 MiB cap fits v7x's
            # physical VMEM and is a raise over the 32 MiB default on v5e/v6e.
            vmem_limit_bytes=64 * 1024 * 1024),
    )(*inputs)

    out = out[..., :Cout]
    out = (out.reshape(B, hw, ww, p, p, Cout)
              .transpose(0, 1, 3, 2, 4, 5)
              .reshape(B, H, W, Cout))
    if masked:
        out = jnp.roll(out, shift=(shift, shift), axis=(1, 2))
    return out


# ----------------------------- reference (pure JAX, f32) -----------------------

def wmsa_reference(x, params, *, window_size, head_dim, attn_type):
    B, H, W, C = x.shape
    p = window_size
    n_heads = C // head_dim
    scale = head_dim ** (-0.5)
    shift = p // 2
    if attn_type != 'W':
        x = jnp.roll(x, shift=(-shift, -shift), axis=(1, 2))
    hw, ww = H // p, W // p
    xw = (x.reshape(B, hw, p, ww, p, C).transpose(0, 1, 3, 2, 4, 5)
           .reshape(B, hw * ww, p * p, C))
    qkv = xw @ params['w_qkv'] + params['b_qkv'][0]
    qkv = qkv.reshape(B, hw * ww, p * p, 3 * n_heads, head_dim).transpose(3, 0, 1, 2, 4)
    q, k, v = qkv[:n_heads], qkv[n_heads:2 * n_heads], qkv[2 * n_heads:]
    sim = jnp.einsum('hbwpc,hbwqc->hbwpq', q, k) * scale
    sim = sim + relative_embedding(params['rel_pos'], p)[:, None, None]
    if attn_type != 'W':
        mask = generate_mask(hw, ww, p, shift)
        sim = jnp.where(mask[None, None], -jnp.inf, sim)
    probs = jax.nn.softmax(sim, axis=-1)
    out = jnp.einsum('hbwij,hbwjc->hbwic', probs, v)
    out = out.transpose(1, 2, 3, 0, 4).reshape(B, hw * ww, p * p, C)
    out = out @ params['w_out'] + params['b_out'][0]
    Cout = out.shape[-1]
    out = (out.reshape(B, hw, ww, p, p, Cout).transpose(0, 1, 3, 2, 4, 5)
              .reshape(B, H, W, Cout))
    if attn_type != 'W':
        out = jnp.roll(out, shift=(shift, shift), axis=(1, 2))
    return out


# ----------------------------- params & main ----------------------------------

def init_params(key, input_dim, output_dim, head_dim, window_size):
    n_heads = input_dim // head_dim
    k1, k2, k3, k4, k5 = jax.random.split(key, 5)
    return dict(
        w_qkv=jax.random.normal(k1, (input_dim, 3 * input_dim), jnp.float32) * 0.02,
        b_qkv=jax.random.normal(k2, (1, 3 * input_dim), jnp.float32) * 0.02,
        w_out=jax.random.normal(k3, (input_dim, output_dim), jnp.float32) * 0.02,
        b_out=jax.random.normal(k4, (1, output_dim), jnp.float32) * 0.02,
        # relative_position_params after the module's view/transpose: [n_heads, 2p-1, 2p-1]
        rel_pos=jax.random.truncated_normal(
            k5, -2.0, 2.0,
            (n_heads, 2 * window_size - 1, 2 * window_size - 1), jnp.float32) * 0.02,
    )


if __name__ == "__main__":
    input_dim, output_dim, head_dim, window_size = 32, 32, 8, 4
    B, H, W = 2, 8, 8

    key = jax.random.PRNGKey(0)
    kx, kp = jax.random.split(key)
    x = jax.random.normal(kx, (B, H, W, input_dim), jnp.float32)
    params = init_params(kp, input_dim, output_dim, head_dim, window_size)

    for attn_type in ('W', 'SW'):                 # 'W' = plain window, 'SW' = shifted
        out = wmsa_forward(x, params, window_size=window_size,
                           head_dim=head_dim, attn_type=attn_type)
        out = jax.block_until_ready(out)
        ref = wmsa_reference(x, params, window_size=window_size,
                             head_dim=head_dim, attn_type=attn_type)
        assert out.shape == (B, H, W, output_dim)
        # tolerance accounts for bf16 matmul inputs + the EUP approximate reciprocal
        # used for the softmax normalization (f32 accumulation everywhere).
        assert jnp.allclose(out, ref, atol=1e-2, rtol=2e-2), f"mismatch for type {attn_type}"

    print("KERNEL_OK")
</pallas_src>

<mosaic_0001>
module attributes {stable_mosaic.version = 11 : i64} {
  func.func @kernel(%arg0: i32, %arg1: i32, %arg2: memref<1x2x16x32xbf16, #tpu.memory_space<vmem>>, %arg3: memref<32x96xbf16, #tpu.memory_space<vmem>>, %arg4: memref<1x96xf32, #tpu.memory_space<vmem>>, %arg5: memref<4x16x16xf32, #tpu.memory_space<vmem>>, %arg6: memref<32x128xbf16, #tpu.memory_space<vmem>>, %arg7: memref<1x128xf32, #tpu.memory_space<vmem>>, %arg8: memref<1x2x16x128xf32, #tpu.memory_space<vmem>>) attributes {dimension_semantics = [#tpu.dimension_semantics<parallel>, #tpu.dimension_semantics<parallel>], iteration_bounds = array<i64: 2, 2>, scalar_prefetch = 0 : i64, scratch_operands = 0 : i64, tpu.core_type = #tpu.core_type<tc>, window_params = [{transform_indices = @transform_0, window_bounds = array<i64: 1, 2, 16, 32>}, {pipeline_mode = #tpu.pipeline_mode<synchronous>, transform_indices = @transform_1, window_bounds = array<i64: 32, 96>}, {pipeline_mode = #tpu.pipeline_mode<synchronous>, transform_indices = @transform_2, window_bounds = array<i64: 1, 96>}, {pipeline_mode = #tpu.pipeline_mode<synchronous>, transform_indices = @transform_3, window_bounds = array<i64: 4, 16, 16>}, {pipeline_mode = #tpu.pipeline_mode<synchronous>, transform_indices = @transform_4, window_bounds = array<i64: 32, 128>}, {pipeline_mode = #tpu.pipeline_mode<synchronous>, transform_indices = @transform_5, window_bounds = array<i64: 1, 128>}, {transform_indices = @transform_6, window_bounds = array<i64: 1, 2, 16, 128>}]} {
    %c0 = arith.constant 0 : index
    %c0_0 = arith.constant 0 : index
    %c0_1 = arith.constant 0 : index
    %c0_2 = arith.constant 0 : index
    %0 = vector.load %arg2[%c0, %c0_0, %c0_1, %c0_2] : memref<1x2x16x32xbf16, #tpu.memory_space<vmem>>, vector<1x2x16x32xbf16>
    %1 = vector.shape_cast %0 : vector<1x2x16x32xbf16> to vector<2x16x32xbf16>
    %2 = vector.shape_cast %1 : vector<2x16x32xbf16> to vector<32x32xbf16>
    %c0_3 = arith.constant 0 : index
    %c0_4 = arith.constant 0 : index
    %3 = vector.load %arg3[%c0_3, %c0_4] : memref<32x96xbf16, #tpu.memory_space<vmem>>, vector<32x96xbf16>
    %cst = arith.constant dense<0.000000e+00> : vector<32x96xf32>
    %4 = tpu.matmul %2, %3, %cst {dimension_numbers = #tpu.dot_dimension_numbers<[1], [0], [0], [1], [0, 0, 1, 1], [], []>} : vector<32x32xbf16>, vector<32x96xbf16>, vector<32x96xf32> -> vector<32x96xf32>
    %c0_5 = arith.constant 0 : index
    %c0_6 = arith.constant 0 : index
    %5 = vector.load %arg4[%c0_5, %c0_6] : memref<1x96xf32, #tpu.memory_space<vmem>>, vector<1x96xf32>
    %6 = vector.broadcast %5 : vector<1x96xf32> to vector<32x96xf32>
    %7 = arith.addf %4, %6 : vector<32x96xf32>
    %8 = arith.truncf %7 : vector<32x96xf32> to vector<32x96xbf16>
    %9 = vector.shape_cast %8 : vector<32x96xbf16> to vector<32x12x8xbf16>
    %10 = tpu.transpose %9, [1, 0, 2] : vector<32x12x8xbf16> -> vector<12x32x8xbf16>
    %11 = vector.extract_strided_slice %10 {offsets = [0, 0, 0], sizes = [4, 32, 8], strides = [1, 1, 1]} : vector<12x32x8xbf16> to vector<4x32x8xbf16>
    %12 = vector.shape_cast %11 : vector<4x32x8xbf16> to vector<8x16x8xbf16>
    %13 = vector.extract_strided_slice %10 {offsets = [4, 0, 0], sizes = [4, 32, 8], strides = [1, 1, 1]} : vector<12x32x8xbf16> to vector<4x32x8xbf16>
    %14 = vector.shape_cast %13 : vector<4x32x8xbf16> to vector<8x16x8xbf16>
    %15 = vector.extract_strided_slice %10 {offsets = [8, 0, 0], sizes = [4, 32, 8], strides = [1, 1, 1]} : vector<12x32x8xbf16> to vector<4x32x8xbf16>
    %16 = vector.shape_cast %15 : vector<4x32x8xbf16> to vector<8x16x8xbf16>
    "tpu.trace_start"() <{level = 10 : i32, message = "bid,bjd->bij"}> : () -> ()
    %cst_7 = arith.constant dense<0.000000e+00> : vector<8x16x16xf32>
    %17 = tpu.matmul %12, %14, %cst_7 {dimension_numbers = #tpu.dot_dimension_numbers<[2], [2], [1], [1], [0, 0, 0, 1, 1, 1], [0], [0]>} : vector<8x16x8xbf16>, vector<8x16x8xbf16>, vector<8x16x16xf32> -> vector<8x16x16xf32>
    "tpu.trace_stop"() : () -> ()
    %18 = vector.shape_cast %17 : vector<8x16x16xf32> to vector<4x2x16x16xf32>
    %c0_8 = arith.constant 0 : index
    %c0_9 = arith.constant 0 : index
    %c0_10 = arith.constant 0 : index
    %19 = vector.load %arg5[%c0_8, %c0_9, %c0_10] : memref<4x16x16xf32, #tpu.memory_space<vmem>>, vector<4x16x16xf32>
    %20 = vector.shape_cast %19 : vector<4x16x16xf32> to vector<4x1x16x16xf32>
    %21 = vector.broadcast %20 : vector<4x1x16x16xf32> to vector<4x2x16x16xf32>
    %22 = arith.addf %18, %21 : vector<4x2x16x16xf32>
    %cst_11 = arith.constant dense<0xFF800000> : vector<4x2x16xf32>
    %23 = vector.multi_reduction <maximumf>, %22, %cst_11 [3] : vector<4x2x16x16xf32> to vector<4x2x16xf32>
    %24 = vector.shape_cast %23 : vector<4x2x16xf32> to vector<4x2x16x1xf32>
    %25 = vector.broadcast %24 : vector<4x2x16x1xf32> to vector<4x2x16x16xf32>
    %26 = arith.subf %22, %25 : vector<4x2x16x16xf32>
    %27 = math.exp %26 : vector<4x2x16x16xf32>
    %cst_12 = arith.constant dense<0.000000e+00> : vector<4x2x16xf32>
    %28 = vector.multi_reduction <add>, %27, %cst_12 [3] : vector<4x2x16x16xf32> to vector<4x2x16xf32>
    %29 = vector.shape_cast %28 : vector<4x2x16xf32> to vector<4x2x16x1xf32>
    %30 = tpu.reciprocal %29 {approx = true} : vector<4x2x16x1xf32> -> vector<4x2x16x1xf32>
    %31 = vector.broadcast %30 : vector<4x2x16x1xf32> to vector<4x2x16x16xf32>
    %32 = arith.mulf %27, %31 : vector<4x2x16x16xf32>
    %33 = vector.shape_cast %32 : vector<4x2x16x16xf32> to vector<8x16x16xf32>
    %34 = arith.truncf %33 : vector<8x16x16xf32> to vector<8x16x16xbf16>
    "tpu.trace_start"() <{level = 10 : i32, message = "bij,bjd->bid"}> : () -> ()
    %cst_13 = arith.constant dense<0.000000e+00> : vector<8x16x8xf32>
    %35 = tpu.matmul %34, %16, %cst_13 {dimension_numbers = #tpu.dot_dimension_numbers<[2], [1], [1], [2], [0, 0, 0, 1, 1, 2], [0], [0]>} : vector<8x16x16xbf16>, vector<8x16x8xbf16>, vector<8x16x8xf32> -> vector<8x16x8xf32>
    "tpu.trace_stop"() : () -> ()
    %36 = arith.truncf %35 : vector<8x16x8xf32> to vector<8x16x8xbf16>
    %37 = vector.shape_cast %36 : vector<8x16x8xbf16> to vector<4x32x8xbf16>
    %38 = tpu.transpose %37, [1, 0, 2] : vector<4x32x8xbf16> -> vector<32x4x8xbf16>
    %39 = vector.shape_cast %38 : vector<32x4x8xbf16> to vector<32x32xbf16>
    %c0_14 = arith.constant 0 : index
    %c0_15 = arith.constant 0 : index
    %40 = vector.load %arg6[%c0_14, %c0_15] : memref<32x128xbf16, #tpu.memory_space<vmem>>, vector<32x128xbf16>
    %cst_16 = arith.constant dense<0.000000e+00> : vector<32x128xf32>
    %41 = tpu.matmul %39, %40, %cst_16 {dimension_numbers = #tpu.dot_dimension_numbers<[1], [0], [0], [1], [0, 0, 1, 1], [], []>} : vector<32x32xbf16>, vector<32x128xbf16>, vector<32x128xf32> -> vector<32x128xf32>
    %c0_17 = arith.constant 0 : index
    %c0_18 = arith.constant 0 : index
    %42 = vector.load %arg7[%c0_17, %c0_18] : memref<1x128xf32, #tpu.memory_space<vmem>>, vector<1x128xf32>
    %43 = vector.broadcast %42 : vector<1x128xf32> to vector<32x128xf32>
    %44 = arith.addf %41, %43 : vector<32x128xf32>
    %45 = vector.shape_cast %44 : vector<32x128xf32> to vector<2x16x128xf32>
    %c0_19 = arith.constant 0 : index
    %c0_20 = arith.constant 0 : index
    %c0_21 = arith.constant 0 : index
    %c0_22 = arith.constant 0 : index
    %46 = vector.load %arg8[%c0_19, %c0_20, %c0_21, %c0_22] : memref<1x2x16x128xf32, #tpu.memory_space<vmem>>, vector<1x2x16x128xf32>
    %47 = vector.shape_cast %46 : vector<1x2x16x128xf32> to vector<2x16x128xf32>
    %48 = vector.shape_cast %45 : vector<2x16x128xf32> to vector<1x2x16x128xf32>
    tpu.vector_store %arg8[%c0_19, %c0_20, %c0_21, %c0_22], %48 {strides = array<i32>} : memref<1x2x16x128xf32, #tpu.memory_space<vmem>>, vector<1x2x16x128xf32>,
    return
  }
  func.func @transform_0(%arg0: i32, %arg1: i32) -> (i32, i32, i32, i32) {
    %c0_i32 = arith.constant 0 : i32
    %c0_i32_0 = arith.constant 0 : i32
    %c0_i32_1 = arith.constant 0 : i32
    return %arg0, %arg1, %c0_i32, %c0_i32_0 : i32, i32, i32, i32
  }
  func.func @transform_1(%arg0: i32, %arg1: i32) -> (i32, i32) {
    %c0_i32 = arith.constant 0 : i32
    %c0_i32_0 = arith.constant 0 : i32
    %c0_i32_1 = arith.constant 0 : i32
    return %c0_i32, %c0_i32_0 : i32, i32
  }
  func.func @transform_2(%arg0: i32, %arg1: i32) -> (i32, i32) {
    %c0_i32 = arith.constant 0 : i32
    %c0_i32_0 = arith.constant 0 : i32
    %c0_i32_1 = arith.constant 0 : i32
    return %c0_i32, %c0_i32_0 : i32, i32
  }
  func.func @transform_3(%arg0: i32, %arg1: i32) -> (i32, i32, i32) {
    %c0_i32 = arith.constant 0 : i32
    %c0_i32_0 = arith.constant 0 : i32
    %c0_i32_1 = arith.constant 0 : i32
    %c0_i32_2 = arith.constant 0 : i32
    return %c0_i32, %c0_i32_0, %c0_i32_1 : i32, i32, i32
  }
  func.func @transform_4(%arg0: i32, %arg1: i32) -> (i32, i32) {
    %c0_i32 = arith.constant 0 : i32
    %c0_i32_0 = arith.constant 0 : i32
    %c0_i32_1 = arith.constant 0 : i32
    return %c0_i32, %c0_i32_0 : i32, i32
  }
  func.func @transform_5(%arg0: i32, %arg1: i32) -> (i32, i32) {
    %c0_i32 = arith.constant 0 : i32
    %c0_i32_0 = arith.constant 0 : i32
    %c0_i32_1 = arith.constant 0 : i32
    return %c0_i32, %c0_i32_0 : i32, i32
  }
  func.func @transform_6(%arg0: i32, %arg1: i32) -> (i32, i32, i32, i32) {
    %c0_i32 = arith.constant 0 : i32
    %c0_i32_0 = arith.constant 0 : i32
    %c0_i32_1 = arith.constant 0 : i32
    return %arg0, %arg1, %c0_i32, %c0_i32_0 : i32, i32, i32, i32
  }
}

</mosaic_0001>

<llo_original>
// kernel: tpu_custom_call.1
$region0: #{tpu_custom_call.1}
  #allocation0 [shape = 'u32[]', space=smem, size = 0x4, offset = 0x4, fixed_abs, tag = 'smem constant byte address 0x4 - core index']
  #allocation1 [shape = 'u32[144,128]{1,0:T(1,128)}', space=vmem, size = 0x12000, scoped, tag = 'internal scratch']
  %s0 = inlined_call_operand.hbm [shape: bf16[2,4,16,32], index: 0, kind: input, shape index: {}]
  %s1 = inlined_call_operand.hbm [shape: bf16[32,96], index: 1, kind: input, shape index: {}]
  %s2 = inlined_call_operand.hbm [shape: f32[1,96], index: 2, kind: input, shape index: {}]
  %s3 = inlined_call_operand.hbm [shape: f32[4,16,16], index: 3, kind: input, shape index: {}]
  %s4 = inlined_call_operand.hbm [shape: bf16[32,128], index: 4, kind: input, shape index: {}]
  %s5 = inlined_call_operand.hbm [shape: f32[1,128], index: 5, kind: input, shape index: {}]
  %s6 = inlined_call_operand.hbm [shape: f32[2,4,16,128], index: 6, kind: output, shape index: {}]
  %s7 = sld [smem:[#allocation0]]
  $region81: #{tpu_custom_call.1} parent=0
    _
  %s9 = ssub.s32 1, %s7
  %s10 = scalar_select 0, %s9, %s7
  $region1: #{tpu_custom_call.1} parent=0
    #allocation2 [shape = 'u8[16384]{0}', space=vmem, size = 0x4000, scoped, tag = 'input window, operand 0']
    #allocation3 [shape = 's32[2]{0}', space=sflag, size = 0x8, scoped, tag = 'scoped memory for tpu_custom_call.1']
    #allocation4 [shape = 's32[2]{0}', space=sflag, size = 0x8, scoped, tag = 'scoped memory for tpu_custom_call.1']
    #allocation5 [shape = 'u8[8192]{0}', space=vmem, size = 0x2000, scoped, tag = 'input window, operand 1, single buffered']
    #allocation6 [shape = 's32[1]{0}', space=sflag, size = 0x4, scoped, tag = 'scoped memory for tpu_custom_call.1']
    #allocation7 [shape = 'u8[512]{0}', space=vmem, size = 0x400, scoped, tag = 'input window, operand 2, single buffered']
    #allocation8 [shape = 'u8[32768]{0}', space=vmem, size = 0x8000, scoped, tag = 'input window, operand 3, single buffered']
    #allocation9 [shape = 's32[1]{0}', space=sflag, size = 0x4, scoped, tag = 'scoped memory for tpu_custom_call.1']
    #allocation10 [shape = 'u8[8192]{0}', space=vmem, size = 0x2000, scoped, tag = 'input window, operand 4, single buffered']
    #allocation11 [shape = 'u8[512]{0}', space=vmem, size = 0x400, scoped, tag = 'input window, operand 5, single buffered']
    #allocation12 [shape = 's32[1]{0}', space=sflag, size = 0x4, scoped, tag = 'scoped memory for tpu_custom_call.1']
    #allocation13 [shape = 'u8[32768]{0}', space=vmem, size = 0x8000, scoped, tag = 'output window, operand 0']
    %11 = vsyncpa [#allocation3], 0
    %s12 = scalar_lea.sflag [#allocation3], 1
    %13 = vsyncpa %s12, 0
    %14 = vsyncpa [#allocation6], 0
    %15 = vsyncpa [#allocation9], 0
    %16 = vsyncpa [#allocation12], 0
    %17 = vsyncpa [#allocation4], 0
    %s18 = scalar_lea.sflag [#allocation4], 1
    %19 = vsyncpa %s18, 0
    loop: start=0, step=1, limit=6
    $region2: #{tpu_custom_call.1} parent=1 // loop_pre_header
      _
    $region3: #{tpu_custom_call.1} parent=1 // loop_header
      %s21 = sphi 0, %s25
      %p22 = scmp.ge.s32.totalorder %s21, 6
      %s28 = sphi 0, %s40
      %s29 = sphi 0, %s36
      %s30 = sphi 0, %s28
      %s31 = sphi 0, %s29
      %s32 = sphi 0, %s30
      %s33 = sphi 0, %s31
      %s45 = sphi 0, %s47
      %s48 = sphi 0, %s45
      %s49 = sphi 0, %s48
      %s65 = sphi 0, %s49
      %s69 = sphi 0, %s69
      %s71 = sphi 0, %s69
      %s72 = sphi 0, %s71
      %s86 = sphi 0, %s72
      %s90 = sphi 0, %s90
      %s92 = sphi 0, %s90
      %s93 = sphi 0, %s92
      %s107 = sphi 0, %s93
      %s111 = sphi 0, %s111
      %s113 = sphi 0, %s111
      %s114 = sphi 0, %s113
      %s128 = sphi 0, %s114
      %s132 = sphi 0, %s132
      %s134 = sphi 0, %s132
      %s135 = sphi 0, %s134
      %s149 = sphi 0, %s135
      %s153 = sphi 0, %s153
      %s155 = sphi 0, %s153
      %s156 = sphi 0, %s155
      %s170 = sphi 0, %s156
      %s178 = sphi 0, %s180
      %s181 = sphi 0, %s178
      %s182 = sphi 0, %s181
      %s198 = sphi 0, %s182
    $region4: #{tpu_custom_call.1} parent=1 // loop_header_branch
      %24 = sbr.rel (%p22) target = $region8
    $region5: #{tpu_custom_call.1} parent=1 // loop_body
      %s26 = ssub.s32 %s21, 1
      %s27 = ssub.s32 %s21, 2
      %s34 = sadd.s32 1, %s29
      %p35 = scmp.ge.s32.totalorder %s34, 2
      %s36 = scalar_select %p35, 0, %s34
      %s37 = sadd.s32 1, %s28
      %s38 = scalar_select %p35, %s37, %s28
      %p39 = scmp.ge.s32.totalorder %s38, 2
      %s40 = scalar_select %p39, 0, %s38
      %s41 = ssub.s32 %s28, %s40
      %s42 = ssub.s32 %s29, %s36
      %s43 = sor.u32 %s41, %s42
      %p44 = scmp.eq.s32.totalorder %s43, 0
      %s46 = sadd.s32 %s45, 1
      %s47 = scalar_select %p44, %s45, %s46
      %p50 = pneg %p44
      %p51 = scmp.eq.s32.totalorder %s21, 3
      %p52 = por %p50, %p51
      %p53 = scmp.ne.s32.totalorder %s45, %s48
      %p54 = scmp.eq.s32.totalorder %s21, 0
      %p55 = por %p53, %p54
      %p56 = scmp.ne.s32.totalorder %s45, %s48
      %p57 = scmp.eq.s32.totalorder %s26, 3
      %p58 = por %p56, %p57
      %p59 = scmp.ne.s32.totalorder %s48, %s49
      %p60 = scmp.eq.s32.totalorder %s26, 0
      %p61 = por %p59, %p60
      %p62 = scmp.ne.s32.totalorder %s48, %s49
      %p63 = scmp.eq.s32.totalorder %s27, 3
      %p64 = por %p62, %p63
      %p66 = scmp.ne.s32.totalorder %s49, %s65
      %p67 = scmp.eq.s32.totalorder %s27, 0
      %p68 = por %p66, %p67
      %s70 = sadd.s32 %s69, 1
      %p73 = scmp.eq.s32.totalorder %s21, 3
      %p74 = scmp.ne.s32.totalorder %s69, %s71
      %p75 = scmp.eq.s32.totalorder %s21, 0
      %p76 = por %p74, %p75
      %p77 = scmp.ne.s32.totalorder %s69, %s71
      %p78 = scmp.eq.s32.totalorder %s26, 3
      %p79 = por %p77, %p78
      %p80 = scmp.ne.s32.totalorder %s71, %s72
      %p81 = scmp.eq.s32.totalorder %s26, 0
      %p82 = por %p80, %p81
      %p83 = scmp.ne.s32.totalorder %s71, %s72
      %p84 = scmp.eq.s32.totalorder %s27, 3
      %p85 = por %p83, %p84
      %p87 = scmp.ne.s32.totalorder %s72, %s86
      %p88 = scmp.eq.s32.totalorder %s27, 0
      %p89 = por %p87, %p88
      %s91 = sadd.s32 %s90, 1
      %p94 = scmp.eq.s32.totalorder %s21, 3
      %p95 = scmp.ne.s32.totalorder %s90, %s92
      %p96 = scmp.eq.s32.totalorder %s21, 0
      %p97 = por %p95, %p96
      %p98 = scmp.ne.s32.totalorder %s90, %s92
      %p99 = scmp.eq.s32.totalorder %s26, 3
      %p100 = por %p98, %p99
      %p101 = scmp.ne.s32.totalorder %s92, %s93
      %p102 = scmp.eq.s32.totalorder %s26, 0
      %p103 = por %p101, %p102
      %p104 = scmp.ne.s32.totalorder %s92, %s93
      %p105 = scmp.eq.s32.totalorder %s27, 3
      %p106 = por %p104, %p105
      %p108 = scmp.ne.s32.totalorder %s93, %s107
      %p109 = scmp.eq.s32.totalorder %s27, 0
      %p110 = por %p108, %p109
      %s112 = sadd.s32 %s111, 1
      %p115 = scmp.eq.s32.totalorder %s21, 3
      %p116 = scmp.ne.s32.totalorder %s111, %s113
      %p117 = scmp.eq.s32.totalorder %s21, 0
      %p118 = por %p116, %p117
      %p119 = scmp.ne.s32.totalorder %s111, %s113
      %p120 = scmp.eq.s32.totalorder %s26, 3
      %p121 = por %p119, %p120
      %p122 = scmp.ne.s32.totalorder %s113, %s114
      %p123 = scmp.eq.s32.totalorder %s26, 0
      %p124 = por %p122, %p123
      %p125 = scmp.ne.s32.totalorder %s113, %s114
      %p126 = scmp.eq.s32.totalorder %s27, 3
      %p127 = por %p125, %p126
      %p129 = scmp.ne.s32.totalorder %s114, %s128
      %p130 = scmp.eq.s32.totalorder %s27, 0
      %p131 = por %p129, %p130
      %s133 = sadd.s32 %s132, 1
      %p136 = scmp.eq.s32.totalorder %s21, 3
      %p137 = scmp.ne.s32.totalorder %s132, %s134
      %p138 = scmp.eq.s32.totalorder %s21, 0
      %p139 = por %p137, %p138
      %p140 = scmp.ne.s32.totalorder %s132, %s134
      %p141 = scmp.eq.s32.totalorder %s26, 3
      %p142 = por %p140, %p141
      %p143 = scmp.ne.s32.totalorder %s134, %s135
      %p144 = scmp.eq.s32.totalorder %s26, 0
      %p145 = por %p143, %p144
      %p146 = scmp.ne.s32.totalorder %s134, %s135
      %p147 = scmp.eq.s32.totalorder %s27, 3
      %p148 = por %p146, %p147
      %p150 = scmp.ne.s32.totalorder %s135, %s149
      %p151 = scmp.eq.s32.totalorder %s27, 0
      %p152 = por %p150, %p151
      %s154 = sadd.s32 %s153, 1
      %p157 = scmp.eq.s32.totalorder %s21, 3
      %p158 = scmp.ne.s32.totalorder %s153, %s155
      %p159 = scmp.eq.s32.totalorder %s21, 0
      %p160 = por %p158, %p159
      %p161 = scmp.ne.s32.totalorder %s153, %s155
      %p162 = scmp.eq.s32.totalorder %s26, 3
      %p163 = por %p161, %p162
      %p164 = scmp.ne.s32.totalorder %s155, %s156
      %p165 = scmp.eq.s32.totalorder %s26, 0
      %p166 = por %p164, %p165
      %p167 = scmp.ne.s32.totalorder %s155, %s156
      %p168 = scmp.eq.s32.totalorder %s27, 3
      %p169 = por %p167, %p168
      %p171 = scmp.ne.s32.totalorder %s156, %s170
      %p172 = scmp.eq.s32.totalorder %s27, 0
      %p173 = por %p171, %p172
      %s174 = ssub.s32 %s28, %s40
      %s175 = ssub.s32 %s29, %s36
      %s176 = sor.u32 %s174, %s175
      %p177 = scmp.eq.s32.totalorder %s176, 0
      %s179 = sadd.s32 %s178, 1
      %s180 = scalar_select %p177, %s178, %s179
      %p183 = pneg %p177
      %p184 = scmp.eq.s32.totalorder %s21, 3
      %p185 = por %p183, %p184
      %p186 = scmp.ne.s32.totalorder %s178, %s181
      %p187 = scmp.eq.s32.totalorder %s21, 0
      %p188 = por %p186, %p187
      %p189 = scmp.ne.s32.totalorder %s178, %s181
      %p190 = scmp.eq.s32.totalorder %s26, 3
      %p191 = por %p189, %p190
      %p192 = scmp.ne.s32.totalorder %s181, %s182
      %p193 = scmp.eq.s32.totalorder %s26, 0
      %p194 = por %p192, %p193
      %p195 = scmp.ne.s32.totalorder %s181, %s182
      %p196 = scmp.eq.s32.totalorder %s27, 3
      %p197 = por %p195, %p196
      %p199 = scmp.ne.s32.totalorder %s182, %s198
      %p200 = scmp.eq.s32.totalorder %s27, 0
      %p201 = por %p199, %p200
      %p202 = scmp.le.s32.totalorder 1, %s21
      %p203 = scmp.lt.s32.totalorder %s21, 5
      %p204 = pnand %p202, %p203
      %p205 = pneg %p204
      // Predicated region
      $region9: #{tpu_custom_call.1} parent=5 // pred_check
        _
      $region10: #{tpu_custom_call.1} parent=5 // pred_check_branch
        %207 = sbr.rel (%p204) target = $region12
      $region11: #{tpu_custom_call.1} parent=5 // pred_region
        %s208 = ssub.s32 %s21, 1
        // Predicated region
        $region13: #{tpu_custom_call.1} parent=11 // pred_check
          %p209 = pneg %p82
        $region14: #{tpu_custom_call.1} parent=11 // pred_check_branch
          %211 = sbr.rel (%p209) target = $region16
        $region15: #{tpu_custom_call.1} parent=11 // pred_region
          %s213 = ssub.s32 256, 256
          %214 = vsyncadd [#allocation6], %s213
          %s215 = sshll.u32 [#allocation5], 4
          %s216 = int_to_ptr.vmem [resolvable:$true] %s215
          %221 = dma.hbm_to_vmem [thread:$0]  %s1, 256, %s216, [#allocation6], 64, 64, 4
        $region16: #{tpu_custom_call.1} parent=11 // pred_fallthru
          _
        // Predicated region
        $region17: #{tpu_custom_call.1} parent=11 // pred_check
          %p222 = pneg %p103
        $region18: #{tpu_custom_call.1} parent=11 // pred_check_branch
          %224 = sbr.rel (%p222) target = $region20
        $region19: #{tpu_custom_call.1} parent=11 // pred_region
          %s226 = ssub.s32 16, 16
          %227 = vsyncadd [#allocation6], %s226
          %s229 = sshll.u32 [#allocation7], 4
          %s230 = int_to_ptr.vmem [resolvable:$true] %s229
          %232 = dma.hbm_to_vmem [thread:$0]  %s2, 16, %s230, [#allocation6]
        $region20: #{tpu_custom_call.1} parent=11 // pred_fallthru
          _
        // Predicated region
        $region21: #{tpu_custom_call.1} parent=11 // pred_check
          %p233 = pneg %p124
        $region22: #{tpu_custom_call.1} parent=11 // pred_check_branch
          %235 = sbr.rel (%p233) target = $region24
        $region23: #{tpu_custom_call.1} parent=11 // pred_region
          %s237 = ssub.s32 1024, 1024
          %238 = vsyncadd [#allocation9], %s237
          %s239 = sshll.u32 [#allocation8], 4
          %s240 = int_to_ptr.vmem [resolvable:$true] %s239
          %245 = dma.hbm_to_vmem [thread:$0]  %s3, 1024, %s240, [#allocation9], 128, 128, 8
        $region24: #{tpu_custom_call.1} parent=11 // pred_fallthru
          _
        // Predicated region
        $region25: #{tpu_custom_call.1} parent=11 // pred_check
          %p246 = pneg %p145
        $region26: #{tpu_custom_call.1} parent=11 // pred_check_branch
          %248 = sbr.rel (%p246) target = $region28
        $region27: #{tpu_custom_call.1} parent=11 // pred_region
          %s250 = ssub.s32 256, 256
          %251 = vsyncadd [#allocation9], %s250
          %s252 = sshll.u32 [#allocation10], 4
          %s253 = int_to_ptr.vmem [resolvable:$true] %s252
          %258 = dma.hbm_to_vmem [thread:$0]  %s4, 256, %s253, [#allocation9], 64, 64, 4
        $region28: #{tpu_custom_call.1} parent=11 // pred_fallthru
          _
        // Predicated region
        $region29: #{tpu_custom_call.1} parent=11 // pred_check
          %p259 = pneg %p166
        $region30: #{tpu_custom_call.1} parent=11 // pred_check_branch
          %261 = sbr.rel (%p259) target = $region32
        $region31: #{tpu_custom_call.1} parent=11 // pred_region
          %s263 = ssub.s32 16, 16
          %264 = vsyncadd [#allocation12], %s263
          %s266 = sshll.u32 [#allocation11], 4
          %s267 = int_to_ptr.vmem [resolvable:$true] %s266
          %269 = dma.hbm_to_vmem [thread:$0]  %s5, 16, %s267, [#allocation12]
        $region32: #{tpu_custom_call.1} parent=11 // pred_fallthru
          _
      $region12: #{tpu_custom_call.1} parent=5 // pred_fallthru
        _
      %p270 = scmp.lt.s32.totalorder %s21, 4
      // Predicated region
      $region33: #{tpu_custom_call.1} parent=5 // pred_check
        %p271 = pneg %p270
      $region34: #{tpu_custom_call.1} parent=5 // pred_check_branch
        %273 = sbr.rel (%p271) target = $region36
      $region35: #{tpu_custom_call.1} parent=5 // pred_region
        // Predicated region
        $region37: #{tpu_custom_call.1} parent=35 // pred_check
          %p274 = pneg %p55
        $region38: #{tpu_custom_call.1} parent=35 // pred_check_branch
          %276 = sbr.rel (%p274) target = $region40
        $region39: #{tpu_custom_call.1} parent=35 // pred_region
          %s277 = sand.u32 %s45, 1
          %s278 = scalar_lea.sflag [#allocation3], %s277
          %s279 = sand.u32 %s45, 1
          %s280 = smul.addr %s279, 16
          %s281 = scalar_lea.vmem [#allocation2], %s280
          %s282 = smul.u32 2, %s29
          %s284 = ssub.s32 256, 256
          %285 = vsyncadd %s278, %s284
          %s286 = smul.addr %s282, 2
          %s287 = smul.addr %s28, 8
          %s288 = sadd.s32 %s286, %s287
          %s289 = smul.addr %s288, 64
          %s290 = scalar_lea.hbm %s0, %s289
          %s291 = sshll.u32 %s281, 4
          %s292 = int_to_ptr.vmem [resolvable:$true] %s291
          %297 = dma.hbm_to_vmem [thread:$0]  %s290, 256, %s292, %s278, 64, 64, 4
        $region40: #{tpu_custom_call.1} parent=35 // pred_fallthru
          _
      $region36: #{tpu_custom_call.1} parent=5 // pred_fallthru
        _
      %p298 = scmp.le.s32.totalorder 1, %s21
      %p299 = scmp.lt.s32.totalorder %s21, 5
      %p300 = pnand %p298, %p299
      %p301 = pneg %p300
      // Predicated region
      $region41: #{tpu_custom_call.1} parent=5 // pred_check
        _
      $region42: #{tpu_custom_call.1} parent=5 // pred_check_branch
        %303 = sbr.rel (%p300) target = $region44
      $region43: #{tpu_custom_call.1} parent=5 // pred_region
        %s304 = ssub.s32 %s21, 1
        %s305 = sand.u32 %s48, 1
        %s306 = scalar_lea.sflag [#allocation3], %s305
        %s307 = sand.u32 %s48, 1
        %s308 = smul.addr %s307, 16
        %s309 = scalar_lea.vmem [#allocation2], %s308
        // Predicated region
        $region45: #{tpu_custom_call.1} parent=43 // pred_check
          %p310 = pneg %p61
        $region46: #{tpu_custom_call.1} parent=43 // pred_check_branch
          %312 = sbr.rel (%p310) target = $region48
        $region47: #{tpu_custom_call.1} parent=43 // pred_region
          %313 = dma.done %s306, 256
        $region48: #{tpu_custom_call.1} parent=43 // pred_fallthru
          _
        // Predicated region
        $region49: #{tpu_custom_call.1} parent=43 // pred_check
          %p314 = pneg %p82
        $region50: #{tpu_custom_call.1} parent=43 // pred_check_branch
          %316 = sbr.rel (%p314) target = $region52
        $region51: #{tpu_custom_call.1} parent=43 // pred_region
          %317 = dma.done [#allocation6], 256
        $region52: #{tpu_custom_call.1} parent=43 // pred_fallthru
          _
        // Predicated region
        $region53: #{tpu_custom_call.1} parent=43 // pred_check
          %p318 = pneg %p103
        $region54: #{tpu_custom_call.1} parent=43 // pred_check_branch
          %320 = sbr.rel (%p318) target = $region56
        $region55: #{tpu_custom_call.1} parent=43 // pred_region
          %321 = dma.done [#allocation6], 16
        $region56: #{tpu_custom_call.1} parent=43 // pred_fallthru
          _
        // Predicated region
        $region57: #{tpu_custom_call.1} parent=43 // pred_check
          %p322 = pneg %p124
        $region58: #{tpu_custom_call.1} parent=43 // pred_check_branch
          %324 = sbr.rel (%p322) target = $region60
        $region59: #{tpu_custom_call.1} parent=43 // pred_region
          %325 = dma.done [#allocation9], 1024
        $region60: #{tpu_custom_call.1} parent=43 // pred_fallthru
          _
        // Predicated region
        $region61: #{tpu_custom_call.1} parent=43 // pred_check
          %p326 = pneg %p145
        $region62: #{tpu_custom_call.1} parent=43 // pred_check_branch
          %328 = sbr.rel (%p326) target = $region64
        $region63: #{tpu_custom_call.1} parent=43 // pred_region
          %329 = dma.done [#allocation9], 256
        $region64: #{tpu_custom_call.1} parent=43 // pred_fallthru
          _
        // Predicated region
        $region65: #{tpu_custom_call.1} parent=43 // pred_check
          %p330 = pneg %p166
        $region66: #{tpu_custom_call.1} parent=43 // pred_check_branch
          %332 = sbr.rel (%p330) target = $region68
        $region67: #{tpu_custom_call.1} parent=43 // pred_region
          %333 = dma.done [#allocation12], 16
        $region68: #{tpu_custom_call.1} parent=43 // pred_fallthru
          _
        %s334 = sand.u32 %s48, 1
        %s335 = scalar_lea.sflag [#allocation3], %s334
        %s336 = sand.u32 %s48, 1
        %s337 = smul.addr %s336, 16
        %s338 = scalar_lea.vmem [#allocation2], %s337
        %p339 = pneg %p61
        %p340 = pneg %p58
        %p341 = pneg %p82
        %p342 = pneg %p79
        %p343 = pneg %p103
        %p344 = pneg %p100
        %p345 = pneg %p124
        %p346 = pneg %p121
        %p347 = pneg %p145
        %p348 = pneg %p142
        %p349 = pneg %p166
        %p350 = pneg %p163
        %p351 = pneg %p194
        %p352 = pneg %p191
        %s353 = sand.u32 %s181, 1
        %s354 = scalar_lea.sflag [#allocation4], %s353
        %s355 = sand.u32 %s181, 1
        %s356 = smul.addr %s355, 32
        %s357 = scalar_lea.vmem [#allocation13], %s356
        %s358 = smul.u32 2, %s31
        %s359 = smul.u32 2, %s31
        %v361 = vld [vmem:[%s309] sm:$0xf]
        %v362 = vld [vmem:[%s309 + $0x4] sm:$0xf]
        %v363 = vld [vmem:[%s309 + $0x8] sm:$0xf]
        %v364 = vld [vmem:[%s309 + $0xc] sm:$0xf]
        %v365 = vld [vmem:[#allocation5] sm:$0xf]
        %v366 = vld [vmem:[#allocation5 + $0x4] sm:$0xf]
        %v367 = vld [vmem:[#allocation5 + $0x8] sm:$0xf]
        %v368 = vld [vmem:[#allocation5 + $0xc] sm:$0xf]
        %v369 = vld [vmem:[#allocation7] sm:$0x1]
        %v371 = vlaneseq
        %v372 = vshrl.u32 %v371, 7
        %v373 = vsub.s32 0, %v372
        %v374 = vrot.slane %v369, %v373
        %v380 = vunpack.c.l.b16 %v361
        %v381 = vunpack.c.l.b16 %v362
        %v382 = vunpack.c.l.b16 %v363
        %v383 = vunpack.c.l.b16 %v364
        %v384 = vpack.c.b16 %v381, %v380
        %v385 = vpack.c.b16 %v383, %v382
        %v390 = vunpack.c.l.b16 %v365
        %v391 = vunpack.c.l.b16 %v366
        %v392 = vunpack.c.l.b16 %v367
        %v393 = vunpack.c.l.b16 %v368
        %v394 = vpack.c.b16 %v391, %v390
        %v395 = vpack.c.b16 %v393, %v392
        %vm398 = vcmask 261120
        %v400 = vsel %vm398, %v384, 0
        %v403 = vsel %vm398, %v385, 0
        %405 = vmatprep.subr.bf16.mxu0 0
        %406 = vmatpush1.bf16.msra.mxu0 %v394
        %407 = vmatprep.subr.bf16.mxu0 0
        %408 = vmatpush1.bf16.msra.mxu0 %v395
        %409 = vmatprep.subr.bf16.mxu0 0
        %410 = vmatpush1.bf16.msra.mxu0 0
        %411 = vmatprep.subr.bf16.mxu0 0
        %412 = vmatpush1.bf16.msra.mxu0 0
        %413 = vmatprep.subr.bf16.mxu0 0
        %414 = vmatpush1.bf16.msra.mxu0 0
        %415 = vmatprep.subr.bf16.mxu0 0
        %416 = vmatpush1.bf16.msra.mxu0 0
        %417 = vmatprep.subr.bf16.mxu0 0
        %418 = vmatpush1.bf16.msra.mxu0 0
        %419 = vmatprep.subr.bf16.mxu0 0
        %420 = vmatpush1.bf16.msra.mxu0 0
        %421 = vmatprep.subr.bf16.mxu0 0
        %422 = vmatpush1.bf16.msra.mxu0 0
        %423 = vmatprep.subr.bf16.mxu0 0
        %424 = vmatpush1.bf16.msra.mxu0 0
        %425 = vmatprep.subr.bf16.mxu0 0
        %426 = vmatpush1.bf16.msra.mxu0 0
        %427 = vmatprep.subr.bf16.mxu0 0
        %428 = vmatpush1.bf16.msra.mxu0 0
        %429 = vmatprep.subr.bf16.mxu0 0
        %430 = vmatpush1.bf16.msra.mxu0 0
        %431 = vmatprep.subr.bf16.mxu0 0
        %432 = vmatpush1.bf16.msra.mxu0 0
        %433 = vmatprep.subr.bf16.mxu0 0
        %434 = vmatpush1.bf16.msra.mxu0 0
        %435 = vmatprep.subr.bf16.mxu0 0
        %436 = vmatpush1.bf16.msra.mxu0 0
        %437 = vmatprep.mubr.bf16.mxu0 0
        %438 = vmatmul.mubr.bf16.gmra.mrb[0].mxu0 %v400
        %v439 = vpop.f32.mrb[0].mxu0
        %v440 = vadd.f32 %v374, %v439
        %v441 = vpop.f32.mrb[0].mxu0
        %v442 = vpop.f32.mrb[0].mxu0
        %v443 = vadd.f32 %v374, %v442
        %v444 = vpop.f32.mrb[0].mxu0
        %445 = vmatprep.mubr.bf16.mxu0 0
        %446 = vmatmul.mubr.bf16.gmra.mrb[0].mxu0 %v403
        %v447 = vpop.f32.mrb[0].mxu0
        %v448 = vadd.f32 %v374, %v447
        %v449 = vpop.f32.mrb[0].mxu0
        %v450 = vpop.f32.mrb[0].mxu0
        %v451 = vadd.f32 %v374, %v450
        %v452 = vpop.f32.mrb[0].mxu0
        %453 = vdwg.mxu0
        %v454 = vpack.c.bf16 %v443, %v440
        %v455 = vpack.c.bf16 %v451, %v448
        %458 = vrot.lane.b32.xlu0 %v454, 120
        %v459 = vpop.permute.xlu0 %458
        %460 = vrot.lane.b32.xlu0 %v455, 120
        %v461 = vpop.permute.xlu0 %460
        %462 = vrot.lane.b32.xlu0 %v454, 112
        %v463 = vpop.permute.xlu0 %462
        %464 = vrot.lane.b32.xlu0 %v455, 112
        %v465 = vpop.permute.xlu0 %464
        %466 = vrot.lane.b32.xlu0 %v454, 104
        %v467 = vpop.permute.xlu0 %466
        %468 = vrot.lane.b32.xlu0 %v455, 104
        %v469 = vpop.permute.xlu0 %468
        %470 = vrot.lane.b32.xlu0 %v454, 96
        %v471 = vpop.permute.xlu0 %470
        %472 = vrot.lane.b32.xlu0 %v455, 96
        %v473 = vpop.permute.xlu0 %472
        %474 = vrot.lane.b32.xlu0 %v454, 88
        %v475 = vpop.permute.xlu0 %474
        %476 = vrot.lane.b32.xlu0 %v455, 88
        %v477 = vpop.permute.xlu0 %476
        %478 = vrot.lane.b32.xlu0 %v454, 80
        %v479 = vpop.permute.xlu0 %478
        %480 = vrot.lane.b32.xlu0 %v455, 80
        %v481 = vpop.permute.xlu0 %480
        %482 = vrot.lane.b32.xlu0 %v454, 72
        %v483 = vpop.permute.xlu0 %482
        %484 = vrot.lane.b32.xlu0 %v455, 72
        %v485 = vpop.permute.xlu0 %484
        %486 = vrot.lane.b32.xlu0 %v454, 64
        %v487 = vpop.permute.xlu0 %486
        %488 = vrot.lane.b32.xlu0 %v455, 64
        %v489 = vpop.permute.xlu0 %488
        %490 = vrot.lane.b32.xlu0 %v454, 56
        %v491 = vpop.permute.xlu0 %490
        %492 = vrot.lane.b32.xlu0 %v455, 56
        %v493 = vpop.permute.xlu0 %492
        %494 = vrot.lane.b32.xlu0 %v454, 48
        %v495 = vpop.permute.xlu0 %494
        %496 = vrot.lane.b32.xlu0 %v455, 48
        %v497 = vpop.permute.xlu0 %496
        %498 = vrot.lane.b32.xlu0 %v454, 40
        %v499 = vpop.permute.xlu0 %498
        %500 = vrot.lane.b32.xlu0 %v455, 40
        %v501 = vpop.permute.xlu0 %500
        %v504 = vpack.i.b16 %v459, %v454
        %v506 = vshrl.u32 %v454, 16
        %v507 = vshrl.u32 %v459, 16
        %v508 = vpack.i.b16 %v507, %v506
        %v512 = vpack.i.b16 %v467, %v463
        %v514 = vshrl.u32 %v463, 16
        %v515 = vshrl.u32 %v467, 16
        %v516 = vpack.i.b16 %v515, %v514
        %v520 = vpack.i.b16 %v475, %v471
        %v522 = vshrl.u32 %v471, 16
        %v523 = vshrl.u32 %v475, 16
        %v524 = vpack.i.b16 %v523, %v522
        %v528 = vpack.i.b16 %v483, %v479
        %v530 = vshrl.u32 %v479, 16
        %v531 = vshrl.u32 %v483, 16
        %v532 = vpack.i.b16 %v531, %v530
        %v536 = vpack.i.b16 %v491, %v487
        %v538 = vshrl.u32 %v487, 16
        %v539 = vshrl.u32 %v491, 16
        %v540 = vpack.i.b16 %v539, %v538
        %v544 = vpack.i.b16 %v499, %v495
        %v546 = vshrl.u32 %v495, 16
        %v547 = vshrl.u32 %v499, 16
        %v548 = vpack.i.b16 %v547, %v546
        %v551 = vpack.i.b16 0, 0
        %v553 = vshrl.u32 0, 16
        %v554 = vpack.i.b16 %v553, %v553
        %v558 = vpack.i.b16 %v461, %v455
        %v560 = vshrl.u32 %v455, 16
        %v561 = vshrl.u32 %v461, 16
        %v562 = vpack.i.b16 %v561, %v560
        %v566 = vpack.i.b16 %v469, %v465
        %v568 = vshrl.u32 %v465, 16
        %v569 = vshrl.u32 %v469, 16
        %v570 = vpack.i.b16 %v569, %v568
        %v574 = vpack.i.b16 %v477, %v473
        %v576 = vshrl.u32 %v473, 16
        %v577 = vshrl.u32 %v477, 16
        %v578 = vpack.i.b16 %v577, %v576
        %v582 = vpack.i.b16 %v485, %v481
        %v584 = vshrl.u32 %v481, 16
        %v585 = vshrl.u32 %v485, 16
        %v586 = vpack.i.b16 %v585, %v584
        %v590 = vpack.i.b16 %v493, %v489
        %v592 = vshrl.u32 %v489, 16
        %v593 = vshrl.u32 %v493, 16
        %v594 = vpack.i.b16 %v593, %v592
        %v598 = vpack.i.b16 %v501, %v497
        %v600 = vshrl.u32 %v497, 16
        %v601 = vshrl.u32 %v501, 16
        %v602 = vpack.i.b16 %v601, %v600
        %v604 = vcombine.low %v504, %v520
        %v605 = vcombine.high %v504, %v520
        %v607 = vunpack.c.l.s4 1983009808
        %v608 = vunpack.c.0.s8 %v607
        %v609 = vlaneseq
        %v610 = vshrl.u32 %v609, 7
        %v611 = vsub.s32 %v608, %v610
        %v612 = vrot.slane %v604, %v611
        %v614 = vunpack.c.l.s4 1983009808
        %v615 = vunpack.c.0.s8 %v614
        %v616 = vlaneseq
        %v617 = vshrl.u32 %v616, 7
        %v618 = vsub.s32 %v615, %v617
        %v619 = vrot.slane %v605, %v618
        %v620 = vcombine.low %v512, %v528
        %v621 = vcombine.high %v512, %v528
        %v623 = vunpack.c.l.s4 1983009808
        %v624 = vunpack.c.0.s8 %v623
        %v625 = vlaneseq
        %v626 = vshrl.u32 %v625, 7
        %v627 = vsub.s32 %v624, %v626
        %v628 = vrot.slane %v620, %v627
        %v630 = vunpack.c.l.s4 1983009808
        %v631 = vunpack.c.0.s8 %v630
        %v632 = vlaneseq
        %v633 = vshrl.u32 %v632, 7
        %v634 = vsub.s32 %v631, %v633
        %v635 = vrot.slane %v621, %v634
        %v636 = vcombine.high %v536, %v551
        %v638 = vunpack.c.l.s4 1983009808
        %v639 = vunpack.c.0.s8 %v638
        %v640 = vlaneseq
        %v641 = vshrl.u32 %v640, 7
        %v642 = vsub.s32 %v639, %v641
        %v643 = vrot.slane %v536, %v642
        %v645 = vunpack.c.l.s4 1983009808
        %v646 = vunpack.c.0.s8 %v645
        %v647 = vlaneseq
        %v648 = vshrl.u32 %v647, 7
        %v649 = vsub.s32 %v646, %v648
        %v650 = vrot.slane %v636, %v649
        %v651 = vcombine.high %v544, %v551
        %v653 = vunpack.c.l.s4 1983009808
        %v654 = vunpack.c.0.s8 %v653
        %v655 = vlaneseq
        %v656 = vshrl.u32 %v655, 7
        %v657 = vsub.s32 %v654, %v656
        %v658 = vrot.slane %v544, %v657
        %v660 = vunpack.c.l.s4 1983009808
        %v661 = vunpack.c.0.s8 %v660
        %v662 = vlaneseq
        %v663 = vshrl.u32 %v662, 7
        %v664 = vsub.s32 %v661, %v663
        %v665 = vrot.slane %v651, %v664
        %v666 = vcombine.low %v612, %v628
        %v667 = vcombine.high %v612, %v628
        %v669 = vunpack.c.l.s4 1934713408
        %v670 = vunpack.c.0.s8 %v669
        %v671 = vlaneseq
        %v672 = vshrl.u32 %v671, 7
        %v673 = vsub.s32 %v670, %v672
        %v674 = vrot.slane %v666, %v673
        %v676 = vunpack.c.l.s4 1934713408
        %v677 = vunpack.c.0.s8 %v676
        %v678 = vlaneseq
        %v679 = vshrl.u32 %v678, 7
        %v680 = vsub.s32 %v677, %v679
        %v681 = vrot.slane %v667, %v680
        %v682 = vcombine.low %v619, %v635
        %v683 = vcombine.high %v619, %v635
        %v685 = vunpack.c.l.s4 1934713408
        %v686 = vunpack.c.0.s8 %v685
        %v687 = vlaneseq
        %v688 = vshrl.u32 %v687, 7
        %v689 = vsub.s32 %v686, %v688
        %v690 = vrot.slane %v682, %v689
        %v692 = vunpack.c.l.s4 1934713408
        %v693 = vunpack.c.0.s8 %v692
        %v694 = vlaneseq
        %v695 = vshrl.u32 %v694, 7
        %v696 = vsub.s32 %v693, %v695
        %v697 = vrot.slane %v683, %v696
        %v698 = vcombine.low %v643, %v658
        %v699 = vcombine.high %v643, %v658
        %v701 = vunpack.c.l.s4 1934713408
        %v702 = vunpack.c.0.s8 %v701
        %v703 = vlaneseq
        %v704 = vshrl.u32 %v703, 7
        %v705 = vsub.s32 %v702, %v704
        %v706 = vrot.slane %v698, %v705
        %v708 = vunpack.c.l.s4 1934713408
        %v709 = vunpack.c.0.s8 %v708
        %v710 = vlaneseq
        %v711 = vshrl.u32 %v710, 7
        %v712 = vsub.s32 %v709, %v711
        %v713 = vrot.slane %v699, %v712
        %v714 = vcombine.low %v650, %v665
        %v715 = vcombine.high %v650, %v665
        %v717 = vunpack.c.l.s4 1934713408
        %v718 = vunpack.c.0.s8 %v717
        %v719 = vlaneseq
        %v720 = vshrl.u32 %v719, 7
        %v721 = vsub.s32 %v718, %v720
        %v722 = vrot.slane %v714, %v721
        %v724 = vunpack.c.l.s4 1934713408
        %v725 = vunpack.c.0.s8 %v724
        %v726 = vlaneseq
        %v727 = vshrl.u32 %v726, 7
        %v728 = vsub.s32 %v725, %v727
        %v729 = vrot.slane %v715, %v728
        %v730 = vcombine.low %v674, %v706
        %v731 = vcombine.high %v674, %v706
        %v732 = vcombine.low %v681, %v713
        %v733 = vcombine.high %v681, %v713
        %v734 = vcombine.low %v690, %v722
        %v735 = vcombine.high %v690, %v722
        %v736 = vcombine.low %v697, %v729
        %v737 = vcombine.high %v697, %v729
        %v738 = vcombine.low %v508, %v524
        %v739 = vcombine.high %v508, %v524
        %v741 = vunpack.c.l.s4 1983009808
        %v742 = vunpack.c.0.s8 %v741
        %v743 = vlaneseq
        %v744 = vshrl.u32 %v743, 7
        %v745 = vsub.s32 %v742, %v744
        %v746 = vrot.slane %v738, %v745
        %v748 = vunpack.c.l.s4 1983009808
        %v749 = vunpack.c.0.s8 %v748
        %v750 = vlaneseq
        %v751 = vshrl.u32 %v750, 7
        %v752 = vsub.s32 %v749, %v751
        %v753 = vrot.slane %v739, %v752
        %v754 = vcombine.low %v516, %v532
        %v755 = vcombine.high %v516, %v532
        %v757 = vunpack.c.l.s4 1983009808
        %v758 = vunpack.c.0.s8 %v757
        %v759 = vlaneseq
        %v760 = vshrl.u32 %v759, 7
        %v761 = vsub.s32 %v758, %v760
        %v762 = vrot.slane %v754, %v761
        %v764 = vunpack.c.l.s4 1983009808
        %v765 = vunpack.c.0.s8 %v764
        %v766 = vlaneseq
        %v767 = vshrl.u32 %v766, 7
        %v768 = vsub.s32 %v765, %v767
        %v769 = vrot.slane %v755, %v768
        %v770 = vcombine.high %v540, %v554
        %v772 = vunpack.c.l.s4 1983009808
        %v773 = vunpack.c.0.s8 %v772
        %v774 = vlaneseq
        %v775 = vshrl.u32 %v774, 7
        %v776 = vsub.s32 %v773, %v775
        %v777 = vrot.slane %v540, %v776
        %v779 = vunpack.c.l.s4 1983009808
        %v780 = vunpack.c.0.s8 %v779
        %v781 = vlaneseq
        %v782 = vshrl.u32 %v781, 7
        %v783 = vsub.s32 %v780, %v782
        %v784 = vrot.slane %v770, %v783
        %v785 = vcombine.high %v548, %v554
        %v787 = vunpack.c.l.s4 1983009808
        %v788 = vunpack.c.0.s8 %v787
        %v789 = vlaneseq
        %v790 = vshrl.u32 %v789, 7
        %v791 = vsub.s32 %v788, %v790
        %v792 = vrot.slane %v548, %v791
        %v794 = vunpack.c.l.s4 1983009808
        %v795 = vunpack.c.0.s8 %v794
        %v796 = vlaneseq
        %v797 = vshrl.u32 %v796, 7
        %v798 = vsub.s32 %v795, %v797
        %v799 = vrot.slane %v785, %v798
        %v800 = vcombine.low %v746, %v762
        %v801 = vcombine.high %v746, %v762
        %v803 = vunpack.c.l.s4 1934713408
        %v804 = vunpack.c.0.s8 %v803
        %v805 = vlaneseq
        %v806 = vshrl.u32 %v805, 7
        %v807 = vsub.s32 %v804, %v806
        %v808 = vrot.slane %v800, %v807
        %v810 = vunpack.c.l.s4 1934713408
        %v811 = vunpack.c.0.s8 %v810
        %v812 = vlaneseq
        %v813 = vshrl.u32 %v812, 7
        %v814 = vsub.s32 %v811, %v813
        %v815 = vrot.slane %v801, %v814
        %v816 = vcombine.low %v753, %v769
        %v817 = vcombine.high %v753, %v769
        %v819 = vunpack.c.l.s4 1934713408
        %v820 = vunpack.c.0.s8 %v819
        %v821 = vlaneseq
        %v822 = vshrl.u32 %v821, 7
        %v823 = vsub.s32 %v820, %v822
        %v824 = vrot.slane %v816, %v823
        %v826 = vunpack.c.l.s4 1934713408
        %v827 = vunpack.c.0.s8 %v826
        %v828 = vlaneseq
        %v829 = vshrl.u32 %v828, 7
        %v830 = vsub.s32 %v827, %v829
        %v831 = vrot.slane %v817, %v830
        %v832 = vcombine.low %v777, %v792
        %v833 = vcombine.high %v777, %v792
        %v835 = vunpack.c.l.s4 1934713408
        %v836 = vunpack.c.0.s8 %v835
        %v837 = vlaneseq
        %v838 = vshrl.u32 %v837, 7
        %v839 = vsub.s32 %v836, %v838
        %v840 = vrot.slane %v832, %v839
        %v842 = vunpack.c.l.s4 1934713408
        %v843 = vunpack.c.0.s8 %v842
        %v844 = vlaneseq
        %v845 = vshrl.u32 %v844, 7
        %v846 = vsub.s32 %v843, %v845
        %v847 = vrot.slane %v833, %v846
        %v848 = vcombine.low %v784, %v799
        %v849 = vcombine.high %v784, %v799
        %v851 = vunpack.c.l.s4 1934713408
        %v852 = vunpack.c.0.s8 %v851
        %v853 = vlaneseq
        %v854 = vshrl.u32 %v853, 7
        %v855 = vsub.s32 %v852, %v854
        %v856 = vrot.slane %v848, %v855
        %v858 = vunpack.c.l.s4 1934713408
        %v859 = vunpack.c.0.s8 %v858
        %v860 = vlaneseq
        %v861 = vshrl.u32 %v860, 7
        %v862 = vsub.s32 %v859, %v861
        %v863 = vrot.slane %v849, %v862
        %v864 = vcombine.low %v808, %v840
        %v865 = vcombine.high %v808, %v840
        %v866 = vcombine.low %v815, %v847
        %v867 = vcombine.high %v815, %v847
        %v868 = vcombine.low %v824, %v856
        %v869 = vcombine.high %v824, %v856
        %v870 = vcombine.low %v831, %v863
        %v871 = vcombine.high %v831, %v863
        %v872 = vcombine.low %v558, %v574
        %v873 = vcombine.high %v558, %v574
        %v875 = vunpack.c.l.s4 1983009808
        %v876 = vunpack.c.0.s8 %v875
        %v877 = vlaneseq
        %v878 = vshrl.u32 %v877, 7
        %v879 = vsub.s32 %v876, %v878
        %v880 = vrot.slane %v872, %v879
        %v882 = vunpack.c.l.s4 1983009808
        %v883 = vunpack.c.0.s8 %v882
        %v884 = vlaneseq
        %v885 = vshrl.u32 %v884, 7
        %v886 = vsub.s32 %v883, %v885
        %v887 = vrot.slane %v873, %v886
        %v888 = vcombine.low %v566, %v582
        %v889 = vcombine.high %v566, %v582
        %v891 = vunpack.c.l.s4 1983009808
        %v892 = vunpack.c.0.s8 %v891
        %v893 = vlaneseq
        %v894 = vshrl.u32 %v893, 7
        %v895 = vsub.s32 %v892, %v894
        %v896 = vrot.slane %v888, %v895
        %v898 = vunpack.c.l.s4 1983009808
        %v899 = vunpack.c.0.s8 %v898
        %v900 = vlaneseq
        %v901 = vshrl.u32 %v900, 7
        %v902 = vsub.s32 %v899, %v901
        %v903 = vrot.slane %v889, %v902
        %v904 = vcombine.high %v590, %v551
        %v906 = vunpack.c.l.s4 1983009808
        %v907 = vunpack.c.0.s8 %v906
        %v908 = vlaneseq
        %v909 = vshrl.u32 %v908, 7
        %v910 = vsub.s32 %v907, %v909
        %v911 = vrot.slane %v590, %v910
        %v913 = vunpack.c.l.s4 1983009808
        %v914 = vunpack.c.0.s8 %v913
        %v915 = vlaneseq
        %v916 = vshrl.u32 %v915, 7
        %v917 = vsub.s32 %v914, %v916
        %v918 = vrot.slane %v904, %v917
        %v919 = vcombine.high %v598, %v551
        %v921 = vunpack.c.l.s4 1983009808
        %v922 = vunpack.c.0.s8 %v921
        %v923 = vlaneseq
        %v924 = vshrl.u32 %v923, 7
        %v925 = vsub.s32 %v922, %v924
        %v926 = vrot.slane %v598, %v925
        %v928 = vunpack.c.l.s4 1983009808
        %v929 = vunpack.c.0.s8 %v928
        %v930 = vlaneseq
        %v931 = vshrl.u32 %v930, 7
        %v932 = vsub.s32 %v929, %v931
        %v933 = vrot.slane %v919, %v932
        %v934 = vcombine.low %v880, %v896
        %v935 = vcombine.high %v880, %v896
        %v937 = vunpack.c.l.s4 1934713408
        %v938 = vunpack.c.0.s8 %v937
        %v939 = vlaneseq
        %v940 = vshrl.u32 %v939, 7
        %v941 = vsub.s32 %v938, %v940
        %v942 = vrot.slane %v934, %v941
        %v944 = vunpack.c.l.s4 1934713408
        %v945 = vunpack.c.0.s8 %v944
        %v946 = vlaneseq
        %v947 = vshrl.u32 %v946, 7
        %v948 = vsub.s32 %v945, %v947
        %v949 = vrot.slane %v935, %v948
        %v950 = vcombine.low %v887, %v903
        %v951 = vcombine.high %v887, %v903
        %v953 = vunpack.c.l.s4 1934713408
        %v954 = vunpack.c.0.s8 %v953
        %v955 = vlaneseq
        %v956 = vshrl.u32 %v955, 7
        %v957 = vsub.s32 %v954, %v956
        %v958 = vrot.slane %v950, %v957
        %v960 = vunpack.c.l.s4 1934713408
        %v961 = vunpack.c.0.s8 %v960
        %v962 = vlaneseq
        %v963 = vshrl.u32 %v962, 7
        %v964 = vsub.s32 %v961, %v963
        %v965 = vrot.slane %v951, %v964
        %v966 = vcombine.low %v911, %v926
        %v967 = vcombine.high %v911, %v926
        %v969 = vunpack.c.l.s4 1934713408
        %v970 = vunpack.c.0.s8 %v969
        %v971 = vlaneseq
        %v972 = vshrl.u32 %v971, 7
        %v973 = vsub.s32 %v970, %v972
        %v974 = vrot.slane %v966, %v973
        %v976 = vunpack.c.l.s4 1934713408
        %v977 = vunpack.c.0.s8 %v976
        %v978 = vlaneseq
        %v979 = vshrl.u32 %v978, 7
        %v980 = vsub.s32 %v977, %v979
        %v981 = vrot.slane %v967, %v980
        %v982 = vcombine.low %v918, %v933
        %v983 = vcombine.high %v918, %v933
        %v985 = vunpack.c.l.s4 1934713408
        %v986 = vunpack.c.0.s8 %v985
        %v987 = vlaneseq
        %v988 = vshrl.u32 %v987, 7
        %v989 = vsub.s32 %v986, %v988
        %v990 = vrot.slane %v982, %v989
        %v992 = vunpack.c.l.s4 1934713408
        %v993 = vunpack.c.0.s8 %v992
        %v994 = vlaneseq
        %v995 = vshrl.u32 %v994, 7
        %v996 = vsub.s32 %v993, %v995
        %v997 = vrot.slane %v983, %v996
        %v998 = vcombine.low %v942, %v974
        %v999 = vcombine.high %v942, %v974
        %v1000 = vcombine.low %v949, %v981
        %v1001 = vcombine.high %v949, %v981
        %v1002 = vcombine.low %v958, %v990
        %v1003 = vcombine.high %v958, %v990
        %v1004 = vcombine.low %v965, %v997
        %v1005 = vcombine.high %v965, %v997
        %v1006 = vcombine.low %v562, %v578
        %v1007 = vcombine.high %v562, %v578
        %v1009 = vunpack.c.l.s4 1983009808
        %v1010 = vunpack.c.0.s8 %v1009
        %v1011 = vlaneseq
        %v1012 = vshrl.u32 %v1011, 7
        %v1013 = vsub.s32 %v1010, %v1012
        %v1014 = vrot.slane %v1006, %v1013
        %v1016 = vunpack.c.l.s4 1983009808
        %v1017 = vunpack.c.0.s8 %v1016
        %v1018 = vlaneseq
        %v1019 = vshrl.u32 %v1018, 7
        %v1020 = vsub.s32 %v1017, %v1019
        %v1021 = vrot.slane %v1007, %v1020
        %v1022 = vcombine.low %v570, %v586
        %v1023 = vcombine.high %v570, %v586
        %v1025 = vunpack.c.l.s4 1983009808
        %v1026 = vunpack.c.0.s8 %v1025
        %v1027 = vlaneseq
        %v1028 = vshrl.u32 %v1027, 7
        %v1029 = vsub.s32 %v1026, %v1028
        %v1030 = vrot.slane %v1022, %v1029
        %v1032 = vunpack.c.l.s4 1983009808
        %v1033 = vunpack.c.0.s8 %v1032
        %v1034 = vlaneseq
        %v1035 = vshrl.u32 %v1034, 7
        %v1036 = vsub.s32 %v1033, %v1035
        %v1037 = vrot.slane %v1023, %v1036
        %v1038 = vcombine.high %v594, %v554
        %v1040 = vunpack.c.l.s4 1983009808
        %v1041 = vunpack.c.0.s8 %v1040
        %v1042 = vlaneseq
        %v1043 = vshrl.u32 %v1042, 7
        %v1044 = vsub.s32 %v1041, %v1043
        %v1045 = vrot.slane %v594, %v1044
        %v1047 = vunpack.c.l.s4 1983009808
        %v1048 = vunpack.c.0.s8 %v1047
        %v1049 = vlaneseq
        %v1050 = vshrl.u32 %v1049, 7
        %v1051 = vsub.s32 %v1048, %v1050
        %v1052 = vrot.slane %v1038, %v1051
        %v1053 = vcombine.high %v602, %v554
        %v1055 = vunpack.c.l.s4 1983009808
        %v1056 = vunpack.c.0.s8 %v1055
        %v1057 = vlaneseq
        %v1058 = vshrl.u32 %v1057, 7
        %v1059 = vsub.s32 %v1056, %v1058
        %v1060 = vrot.slane %v602, %v1059
        %v1062 = vunpack.c.l.s4 1983009808
        %v1063 = vunpack.c.0.s8 %v1062
        %v1064 = vlaneseq
        %v1065 = vshrl.u32 %v1064, 7
        %v1066 = vsub.s32 %v1063, %v1065
        %v1067 = vrot.slane %v1053, %v1066
        %v1068 = vcombine.low %v1014, %v1030
        %v1069 = vcombine.high %v1014, %v1030
        %v1071 = vunpack.c.l.s4 1934713408
        %v1072 = vunpack.c.0.s8 %v1071
        %v1073 = vlaneseq
        %v1074 = vshrl.u32 %v1073, 7
        %v1075 = vsub.s32 %v1072, %v1074
        %v1076 = vrot.slane %v1068, %v1075
        %v1078 = vunpack.c.l.s4 1934713408
        %v1079 = vunpack.c.0.s8 %v1078
        %v1080 = vlaneseq
        %v1081 = vshrl.u32 %v1080, 7
        %v1082 = vsub.s32 %v1079, %v1081
        %v1083 = vrot.slane %v1069, %v1082
        %v1084 = vcombine.low %v1021, %v1037
        %v1085 = vcombine.high %v1021, %v1037
        %v1087 = vunpack.c.l.s4 1934713408
        %v1088 = vunpack.c.0.s8 %v1087
        %v1089 = vlaneseq
        %v1090 = vshrl.u32 %v1089, 7
        %v1091 = vsub.s32 %v1088, %v1090
        %v1092 = vrot.slane %v1084, %v1091
        %v1094 = vunpack.c.l.s4 1934713408
        %v1095 = vunpack.c.0.s8 %v1094
        %v1096 = vlaneseq
        %v1097 = vshrl.u32 %v1096, 7
        %v1098 = vsub.s32 %v1095, %v1097
        %v1099 = vrot.slane %v1085, %v1098
        %v1100 = vcombine.low %v1045, %v1060
        %v1101 = vcombine.high %v1045, %v1060
        %v1103 = vunpack.c.l.s4 1934713408
        %v1104 = vunpack.c.0.s8 %v1103
        %v1105 = vlaneseq
        %v1106 = vshrl.u32 %v1105, 7
        %v1107 = vsub.s32 %v1104, %v1106
        %v1108 = vrot.slane %v1100, %v1107
        %v1110 = vunpack.c.l.s4 1934713408
        %v1111 = vunpack.c.0.s8 %v1110
        %v1112 = vlaneseq
        %v1113 = vshrl.u32 %v1112, 7
        %v1114 = vsub.s32 %v1111, %v1113
        %v1115 = vrot.slane %v1101, %v1114
        %v1116 = vcombine.low %v1052, %v1067
        %v1117 = vcombine.high %v1052, %v1067
        %v1119 = vunpack.c.l.s4 1934713408
        %v1120 = vunpack.c.0.s8 %v1119
        %v1121 = vlaneseq
        %v1122 = vshrl.u32 %v1121, 7
        %v1123 = vsub.s32 %v1120, %v1122
        %v1124 = vrot.slane %v1116, %v1123
        %v1126 = vunpack.c.l.s4 1934713408
        %v1127 = vunpack.c.0.s8 %v1126
        %v1128 = vlaneseq
        %v1129 = vshrl.u32 %v1128, 7
        %v1130 = vsub.s32 %v1127, %v1129
        %v1131 = vrot.slane %v1117, %v1130
        %v1132 = vcombine.low %v1076, %v1108
        %v1133 = vcombine.high %v1076, %v1108
        %v1134 = vcombine.low %v1083, %v1115
        %v1135 = vcombine.high %v1083, %v1115
        %v1136 = vcombine.low %v1092, %v1124
        %v1137 = vcombine.high %v1092, %v1124
        %v1138 = vcombine.low %v1099, %v1131
        %v1139 = vcombine.high %v1099, %v1131
        %v1140 = vcombine.low %v730, %v732
        %v1141 = vcombine.high %v730, %v732
        %v1143 = vunpack.c.l.s4 1983009808
        %v1144 = vunpack.c.0.s8 %v1143
        %v1145 = vlaneseq
        %v1146 = vshrl.u32 %v1145, 7
        %v1147 = vsub.s32 %v1144, %v1146
        %v1148 = vrot.slane %v1140, %v1147
        %v1150 = vunpack.c.l.s4 1983009808
        %v1151 = vunpack.c.0.s8 %v1150
        %v1152 = vlaneseq
        %v1153 = vshrl.u32 %v1152, 7
        %v1154 = vsub.s32 %v1151, %v1153
        %v1155 = vrot.slane %v1141, %v1154
        %v1156 = vcombine.low %v731, %v733
        %v1157 = vcombine.high %v731, %v733
        %v1159 = vunpack.c.l.s4 1983009808
        %v1160 = vunpack.c.0.s8 %v1159
        %v1161 = vlaneseq
        %v1162 = vshrl.u32 %v1161, 7
        %v1163 = vsub.s32 %v1160, %v1162
        %v1164 = vrot.slane %v1156, %v1163
        %v1166 = vunpack.c.l.s4 1983009808
        %v1167 = vunpack.c.0.s8 %v1166
        %v1168 = vlaneseq
        %v1169 = vshrl.u32 %v1168, 7
        %v1170 = vsub.s32 %v1167, %v1169
        %v1171 = vrot.slane %v1157, %v1170
        %v1172 = vcombine.low %v734, %v736
        %v1173 = vcombine.high %v734, %v736
        %v1175 = vunpack.c.l.s4 1983009808
        %v1176 = vunpack.c.0.s8 %v1175
        %v1177 = vlaneseq
        %v1178 = vshrl.u32 %v1177, 7
        %v1179 = vsub.s32 %v1176, %v1178
        %v1180 = vrot.slane %v1172, %v1179
        %v1182 = vunpack.c.l.s4 1983009808
        %v1183 = vunpack.c.0.s8 %v1182
        %v1184 = vlaneseq
        %v1185 = vshrl.u32 %v1184, 7
        %v1186 = vsub.s32 %v1183, %v1185
        %v1187 = vrot.slane %v1173, %v1186
        %v1188 = vcombine.low %v735, %v737
        %v1189 = vcombine.high %v735, %v737
        %v1191 = vunpack.c.l.s4 1983009808
        %v1192 = vunpack.c.0.s8 %v1191
        %v1193 = vlaneseq
        %v1194 = vshrl.u32 %v1193, 7
        %v1195 = vsub.s32 %v1192, %v1194
        %v1196 = vrot.slane %v1188, %v1195
        %v1198 = vunpack.c.l.s4 1983009808
        %v1199 = vunpack.c.0.s8 %v1198
        %v1200 = vlaneseq
        %v1201 = vshrl.u32 %v1200, 7
        %v1202 = vsub.s32 %v1199, %v1201
        %v1203 = vrot.slane %v1189, %v1202
        %v1204 = vcombine.low %v1148, %v1164
        %v1205 = vcombine.high %v1148, %v1164
        %v1207 = vunpack.c.l.s4 1934713408
        %v1208 = vunpack.c.0.s8 %v1207
        %v1209 = vlaneseq
        %v1210 = vshrl.u32 %v1209, 7
        %v1211 = vsub.s32 %v1208, %v1210
        %v1212 = vrot.slane %v1204, %v1211
        %v1214 = vunpack.c.l.s4 1934713408
        %v1215 = vunpack.c.0.s8 %v1214
        %v1216 = vlaneseq
        %v1217 = vshrl.u32 %v1216, 7
        %v1218 = vsub.s32 %v1215, %v1217
        %v1219 = vrot.slane %v1205, %v1218
        %v1220 = vcombine.low %v1155, %v1171
        %v1222 = vunpack.c.l.s4 1934713408
        %v1223 = vunpack.c.0.s8 %v1222
        %v1224 = vlaneseq
        %v1225 = vshrl.u32 %v1224, 7
        %v1226 = vsub.s32 %v1223, %v1225
        %v1227 = vrot.slane %v1220, %v1226
        %v1228 = vcombine.low %v1180, %v1196
        %v1229 = vcombine.high %v1180, %v1196
        %v1231 = vunpack.c.l.s4 1934713408
        %v1232 = vunpack.c.0.s8 %v1231
        %v1233 = vlaneseq
        %v1234 = vshrl.u32 %v1233, 7
        %v1235 = vsub.s32 %v1232, %v1234
        %v1236 = vrot.slane %v1228, %v1235
        %v1238 = vunpack.c.l.s4 1934713408
        %v1239 = vunpack.c.0.s8 %v1238
        %v1240 = vlaneseq
        %v1241 = vshrl.u32 %v1240, 7
        %v1242 = vsub.s32 %v1239, %v1241
        %v1243 = vrot.slane %v1229, %v1242
        %v1244 = vcombine.low %v1187, %v1203
        %v1246 = vunpack.c.l.s4 1934713408
        %v1247 = vunpack.c.0.s8 %v1246
        %v1248 = vlaneseq
        %v1249 = vshrl.u32 %v1248, 7
        %v1250 = vsub.s32 %v1247, %v1249
        %v1251 = vrot.slane %v1244, %v1250
        %v1252 = vcombine.low %v1212, %v1236
        %v1253 = vcombine.high %v1212, %v1236
        %v1254 = vcombine.low %v1219, %v1243
        %v1255 = vcombine.high %v1219, %v1243
        %v1256 = vcombine.low %v1227, %v1251
        %v1257 = vcombine.high %v1227, %v1251
        %v1258 = vcombine.low %v864, %v866
        %v1259 = vcombine.high %v864, %v866
        %v1261 = vunpack.c.l.s4 1983009808
        %v1262 = vunpack.c.0.s8 %v1261
        %v1263 = vlaneseq
        %v1264 = vshrl.u32 %v1263, 7
        %v1265 = vsub.s32 %v1262, %v1264
        %v1266 = vrot.slane %v1258, %v1265
        %v1268 = vunpack.c.l.s4 1983009808
        %v1269 = vunpack.c.0.s8 %v1268
        %v1270 = vlaneseq
        %v1271 = vshrl.u32 %v1270, 7
        %v1272 = vsub.s32 %v1269, %v1271
        %v1273 = vrot.slane %v1259, %v1272
        %v1274 = vcombine.low %v865, %v867
        %v1275 = vcombine.high %v865, %v867
        %v1277 = vunpack.c.l.s4 1983009808
        %v1278 = vunpack.c.0.s8 %v1277
        %v1279 = vlaneseq
        %v1280 = vshrl.u32 %v1279, 7
        %v1281 = vsub.s32 %v1278, %v1280
        %v1282 = vrot.slane %v1274, %v1281
        %v1284 = vunpack.c.l.s4 1983009808
        %v1285 = vunpack.c.0.s8 %v1284
        %v1286 = vlaneseq
        %v1287 = vshrl.u32 %v1286, 7
        %v1288 = vsub.s32 %v1285, %v1287
        %v1289 = vrot.slane %v1275, %v1288
        %v1290 = vcombine.low %v868, %v870
        %v1291 = vcombine.high %v868, %v870
        %v1293 = vunpack.c.l.s4 1983009808
        %v1294 = vunpack.c.0.s8 %v1293
        %v1295 = vlaneseq
        %v1296 = vshrl.u32 %v1295, 7
        %v1297 = vsub.s32 %v1294, %v1296
        %v1298 = vrot.slane %v1290, %v1297
        %v1300 = vunpack.c.l.s4 1983009808
        %v1301 = vunpack.c.0.s8 %v1300
        %v1302 = vlaneseq
        %v1303 = vshrl.u32 %v1302, 7
        %v1304 = vsub.s32 %v1301, %v1303
        %v1305 = vrot.slane %v1291, %v1304
        %v1306 = vcombine.low %v869, %v871
        %v1307 = vcombine.high %v869, %v871
        %v1309 = vunpack.c.l.s4 1983009808
        %v1310 = vunpack.c.0.s8 %v1309
        %v1311 = vlaneseq
        %v1312 = vshrl.u32 %v1311, 7
        %v1313 = vsub.s32 %v1310, %v1312
        %v1314 = vrot.slane %v1306, %v1313
        %v1316 = vunpack.c.l.s4 1983009808
        %v1317 = vunpack.c.0.s8 %v1316
        %v1318 = vlaneseq
        %v1319 = vshrl.u32 %v1318, 7
        %v1320 = vsub.s32 %v1317, %v1319
        %v1321 = vrot.slane %v1307, %v1320
        %v1322 = vcombine.low %v1266, %v1282
        %v1323 = vcombine.high %v1266, %v1282
        %v1325 = vunpack.c.l.s4 1934713408
        %v1326 = vunpack.c.0.s8 %v1325
        %v1327 = vlaneseq
        %v1328 = vshrl.u32 %v1327, 7
        %v1329 = vsub.s32 %v1326, %v1328
        %v1330 = vrot.slane %v1322, %v1329
        %v1332 = vunpack.c.l.s4 1934713408
        %v1333 = vunpack.c.0.s8 %v1332
        %v1334 = vlaneseq
        %v1335 = vshrl.u32 %v1334, 7
        %v1336 = vsub.s32 %v1333, %v1335
        %v1337 = vrot.slane %v1323, %v1336
        %v1338 = vcombine.low %v1273, %v1289
        %v1340 = vunpack.c.l.s4 1934713408
        %v1341 = vunpack.c.0.s8 %v1340
        %v1342 = vlaneseq
        %v1343 = vshrl.u32 %v1342, 7
        %v1344 = vsub.s32 %v1341, %v1343
        %v1345 = vrot.slane %v1338, %v1344
        %v1346 = vcombine.low %v1298, %v1314
        %v1347 = vcombine.high %v1298, %v1314
        %v1349 = vunpack.c.l.s4 1934713408
        %v1350 = vunpack.c.0.s8 %v1349
        %v1351 = vlaneseq
        %v1352 = vshrl.u32 %v1351, 7
        %v1353 = vsub.s32 %v1350, %v1352
        %v1354 = vrot.slane %v1346, %v1353
        %v1356 = vunpack.c.l.s4 1934713408
        %v1357 = vunpack.c.0.s8 %v1356
        %v1358 = vlaneseq
        %v1359 = vshrl.u32 %v1358, 7
        %v1360 = vsub.s32 %v1357, %v1359
        %v1361 = vrot.slane %v1347, %v1360
        %v1362 = vcombine.low %v1305, %v1321
        %v1364 = vunpack.c.l.s4 1934713408
        %v1365 = vunpack.c.0.s8 %v1364
        %v1366 = vlaneseq
        %v1367 = vshrl.u32 %v1366, 7
        %v1368 = vsub.s32 %v1365, %v1367
        %v1369 = vrot.slane %v1362, %v1368
        %v1370 = vcombine.low %v1330, %v1354
        %v1371 = vcombine.high %v1330, %v1354
        %v1372 = vcombine.low %v1337, %v1361
        %v1373 = vcombine.high %v1337, %v1361
        %v1374 = vcombine.low %v1345, %v1369
        %v1375 = vcombine.high %v1345, %v1369
        %v1376 = vcombine.low %v998, %v1000
        %v1377 = vcombine.high %v998, %v1000
        %v1379 = vunpack.c.l.s4 1983009808
        %v1380 = vunpack.c.0.s8 %v1379
        %v1381 = vlaneseq
        %v1382 = vshrl.u32 %v1381, 7
        %v1383 = vsub.s32 %v1380, %v1382
        %v1384 = vrot.slane %v1376, %v1383
        %v1386 = vunpack.c.l.s4 1983009808
        %v1387 = vunpack.c.0.s8 %v1386
        %v1388 = vlaneseq
        %v1389 = vshrl.u32 %v1388, 7
        %v1390 = vsub.s32 %v1387, %v1389
        %v1391 = vrot.slane %v1377, %v1390
        %v1392 = vcombine.low %v999, %v1001
        %v1393 = vcombine.high %v999, %v1001
        %v1395 = vunpack.c.l.s4 1983009808
        %v1396 = vunpack.c.0.s8 %v1395
        %v1397 = vlaneseq
        %v1398 = vshrl.u32 %v1397, 7
        %v1399 = vsub.s32 %v1396, %v1398
        %v1400 = vrot.slane %v1392, %v1399
        %v1402 = vunpack.c.l.s4 1983009808
        %v1403 = vunpack.c.0.s8 %v1402
        %v1404 = vlaneseq
        %v1405 = vshrl.u32 %v1404, 7
        %v1406 = vsub.s32 %v1403, %v1405
        %v1407 = vrot.slane %v1393, %v1406
        %v1408 = vcombine.low %v1002, %v1004
        %v1409 = vcombine.high %v1002, %v1004
        %v1411 = vunpack.c.l.s4 1983009808
        %v1412 = vunpack.c.0.s8 %v1411
        %v1413 = vlaneseq
        %v1414 = vshrl.u32 %v1413, 7
        %v1415 = vsub.s32 %v1412, %v1414
        %v1416 = vrot.slane %v1408, %v1415
        %v1418 = vunpack.c.l.s4 1983009808
        %v1419 = vunpack.c.0.s8 %v1418
        %v1420 = vlaneseq
        %v1421 = vshrl.u32 %v1420, 7
        %v1422 = vsub.s32 %v1419, %v1421
        %v1423 = vrot.slane %v1409, %v1422
        %v1424 = vcombine.low %v1003, %v1005
        %v1425 = vcombine.high %v1003, %v1005
        %v1427 = vunpack.c.l.s4 1983009808
        %v1428 = vunpack.c.0.s8 %v1427
        %v1429 = vlaneseq
        %v1430 = vshrl.u32 %v1429, 7
        %v1431 = vsub.s32 %v1428, %v1430
        %v1432 = vrot.slane %v1424, %v1431
        %v1434 = vunpack.c.l.s4 1983009808
        %v1435 = vunpack.c.0.s8 %v1434
        %v1436 = vlaneseq
        %v1437 = vshrl.u32 %v1436, 7
        %v1438 = vsub.s32 %v1435, %v1437
        %v1439 = vrot.slane %v1425, %v1438
        %v1440 = vcombine.low %v1384, %v1400
        %v1441 = vcombine.high %v1384, %v1400
        %v1443 = vunpack.c.l.s4 1934713408
        %v1444 = vunpack.c.0.s8 %v1443
        %v1445 = vlaneseq
        %v1446 = vshrl.u32 %v1445, 7
        %v1447 = vsub.s32 %v1444, %v1446
        %v1448 = vrot.slane %v1440, %v1447
        %v1450 = vunpack.c.l.s4 1934713408
        %v1451 = vunpack.c.0.s8 %v1450
        %v1452 = vlaneseq
        %v1453 = vshrl.u32 %v1452, 7
        %v1454 = vsub.s32 %v1451, %v1453
        %v1455 = vrot.slane %v1441, %v1454
        %v1456 = vcombine.low %v1391, %v1407
        %v1458 = vunpack.c.l.s4 1934713408
        %v1459 = vunpack.c.0.s8 %v1458
        %v1460 = vlaneseq
        %v1461 = vshrl.u32 %v1460, 7
        %v1462 = vsub.s32 %v1459, %v1461
        %v1463 = vrot.slane %v1456, %v1462
        %v1464 = vcombine.low %v1416, %v1432
        %v1465 = vcombine.high %v1416, %v1432
        %v1467 = vunpack.c.l.s4 1934713408
        %v1468 = vunpack.c.0.s8 %v1467
        %v1469 = vlaneseq
        %v1470 = vshrl.u32 %v1469, 7
        %v1471 = vsub.s32 %v1468, %v1470
        %v1472 = vrot.slane %v1464, %v1471
        %v1474 = vunpack.c.l.s4 1934713408
        %v1475 = vunpack.c.0.s8 %v1474
        %v1476 = vlaneseq
        %v1477 = vshrl.u32 %v1476, 7
        %v1478 = vsub.s32 %v1475, %v1477
        %v1479 = vrot.slane %v1465, %v1478
        %v1480 = vcombine.low %v1423, %v1439
        %v1482 = vunpack.c.l.s4 1934713408
        %v1483 = vunpack.c.0.s8 %v1482
        %v1484 = vlaneseq
        %v1485 = vshrl.u32 %v1484, 7
        %v1486 = vsub.s32 %v1483, %v1485
        %v1487 = vrot.slane %v1480, %v1486
        %v1488 = vcombine.low %v1448, %v1472
        %v1489 = vcombine.high %v1448, %v1472
        %v1490 = vcombine.low %v1455, %v1479
        %v1491 = vcombine.high %v1455, %v1479
        %v1492 = vcombine.low %v1463, %v1487
        %v1493 = vcombine.high %v1463, %v1487
        %v1494 = vcombine.low %v1132, %v1134
        %v1495 = vcombine.high %v1132, %v1134
        %v1497 = vunpack.c.l.s4 1983009808
        %v1498 = vunpack.c.0.s8 %v1497
        %v1499 = vlaneseq
        %v1500 = vshrl.u32 %v1499, 7
        %v1501 = vsub.s32 %v1498, %v1500
        %v1502 = vrot.slane %v1494, %v1501
        %v1504 = vunpack.c.l.s4 1983009808
        %v1505 = vunpack.c.0.s8 %v1504
        %v1506 = vlaneseq
        %v1507 = vshrl.u32 %v1506, 7
        %v1508 = vsub.s32 %v1505, %v1507
        %v1509 = vrot.slane %v1495, %v1508
        %v1510 = vcombine.low %v1133, %v1135
        %v1511 = vcombine.high %v1133, %v1135
        %v1513 = vunpack.c.l.s4 1983009808
        %v1514 = vunpack.c.0.s8 %v1513
        %v1515 = vlaneseq
        %v1516 = vshrl.u32 %v1515, 7
        %v1517 = vsub.s32 %v1514, %v1516
        %v1518 = vrot.slane %v1510, %v1517
        %v1520 = vunpack.c.l.s4 1983009808
        %v1521 = vunpack.c.0.s8 %v1520
        %v1522 = vlaneseq
        %v1523 = vshrl.u32 %v1522, 7
        %v1524 = vsub.s32 %v1521, %v1523
        %v1525 = vrot.slane %v1511, %v1524
        %v1526 = vcombine.low %v1136, %v1138
        %v1527 = vcombine.high %v1136, %v1138
        %v1529 = vunpack.c.l.s4 1983009808
        %v1530 = vunpack.c.0.s8 %v1529
        %v1531 = vlaneseq
        %v1532 = vshrl.u32 %v1531, 7
        %v1533 = vsub.s32 %v1530, %v1532
        %v1534 = vrot.slane %v1526, %v1533
        %v1536 = vunpack.c.l.s4 1983009808
        %v1537 = vunpack.c.0.s8 %v1536
        %v1538 = vlaneseq
        %v1539 = vshrl.u32 %v1538, 7
        %v1540 = vsub.s32 %v1537, %v1539
        %v1541 = vrot.slane %v1527, %v1540
        %v1542 = vcombine.low %v1137, %v1139
        %v1543 = vcombine.high %v1137, %v1139
        %v1545 = vunpack.c.l.s4 1983009808
        %v1546 = vunpack.c.0.s8 %v1545
        %v1547 = vlaneseq
        %v1548 = vshrl.u32 %v1547, 7
        %v1549 = vsub.s32 %v1546, %v1548
        %v1550 = vrot.slane %v1542, %v1549
        %v1552 = vunpack.c.l.s4 1983009808
        %v1553 = vunpack.c.0.s8 %v1552
        %v1554 = vlaneseq
        %v1555 = vshrl.u32 %v1554, 7
        %v1556 = vsub.s32 %v1553, %v1555
        %v1557 = vrot.slane %v1543, %v1556
        %v1558 = vcombine.low %v1502, %v1518
        %v1559 = vcombine.high %v1502, %v1518
        %v1561 = vunpack.c.l.s4 1934713408
        %v1562 = vunpack.c.0.s8 %v1561
        %v1563 = vlaneseq
        %v1564 = vshrl.u32 %v1563, 7
        %v1565 = vsub.s32 %v1562, %v1564
        %v1566 = vrot.slane %v1558, %v1565
        %v1568 = vunpack.c.l.s4 1934713408
        %v1569 = vunpack.c.0.s8 %v1568
        %v1570 = vlaneseq
        %v1571 = vshrl.u32 %v1570, 7
        %v1572 = vsub.s32 %v1569, %v1571
        %v1573 = vrot.slane %v1559, %v1572
        %v1574 = vcombine.low %v1509, %v1525
        %v1576 = vunpack.c.l.s4 1934713408
        %v1577 = vunpack.c.0.s8 %v1576
        %v1578 = vlaneseq
        %v1579 = vshrl.u32 %v1578, 7
        %v1580 = vsub.s32 %v1577, %v1579
        %v1581 = vrot.slane %v1574, %v1580
        %v1582 = vcombine.low %v1534, %v1550
        %v1583 = vcombine.high %v1534, %v1550
        %v1585 = vunpack.c.l.s4 1934713408
        %v1586 = vunpack.c.0.s8 %v1585
        %v1587 = vlaneseq
        %v1588 = vshrl.u32 %v1587, 7
        %v1589 = vsub.s32 %v1586, %v1588
        %v1590 = vrot.slane %v1582, %v1589
        %v1592 = vunpack.c.l.s4 1934713408
        %v1593 = vunpack.c.0.s8 %v1592
        %v1594 = vlaneseq
        %v1595 = vshrl.u32 %v1594, 7
        %v1596 = vsub.s32 %v1593, %v1595
        %v1597 = vrot.slane %v1583, %v1596
        %v1598 = vcombine.low %v1541, %v1557
        %v1600 = vunpack.c.l.s4 1934713408
        %v1601 = vunpack.c.0.s8 %v1600
        %v1602 = vlaneseq
        %v1603 = vshrl.u32 %v1602, 7
        %v1604 = vsub.s32 %v1601, %v1603
        %v1605 = vrot.slane %v1598, %v1604
        %v1606 = vcombine.low %v1566, %v1590
        %v1607 = vcombine.high %v1566, %v1590
        %v1608 = vcombine.low %v1573, %v1597
        %v1609 = vcombine.high %v1573, %v1597
        %v1610 = vcombine.low %v1581, %v1605
        %v1611 = vcombine.high %v1581, %v1605
        %v1614 = vpack.i.b16 %v1370, %v1252
        %v1615 = vshrl.u32 %v1252, 16
        %v1616 = vshrl.u32 %v1370, 16
        %v1617 = vpack.i.b16 %v1616, %v1615
        %v1620 = vpack.i.b16 %v1371, %v1253
        %v1621 = vshrl.u32 %v1253, 16
        %v1622 = vshrl.u32 %v1371, 16
        %v1623 = vpack.i.b16 %v1622, %v1621
        %v1626 = vpack.i.b16 %v1372, %v1254
        %v1627 = vshrl.u32 %v1254, 16
        %v1628 = vshrl.u32 %v1372, 16
        %v1629 = vpack.i.b16 %v1628, %v1627
        %v1632 = vpack.i.b16 %v1373, %v1255
        %v1633 = vshrl.u32 %v1255, 16
        %v1634 = vshrl.u32 %v1373, 16
        %v1635 = vpack.i.b16 %v1634, %v1633
        %v1638 = vpack.i.b16 %v1374, %v1256
        %v1640 = vshrl.u32 %v1256, 16
        %v1641 = vshrl.u32 %v1374, 16
        %v1642 = vpack.i.b16 %v1641, %v1640
        %v1646 = vpack.i.b16 %v1375, %v1257
        %v1648 = vshrl.u32 %v1257, 16
        %v1649 = vshrl.u32 %v1375, 16
        %v1650 = vpack.i.b16 %v1649, %v1648
        %v1654 = vpack.i.b16 %v1606, %v1488
        %v1655 = vshrl.u32 %v1488, 16
        %v1656 = vshrl.u32 %v1606, 16
        %v1657 = vpack.i.b16 %v1656, %v1655
        %v1660 = vpack.i.b16 %v1607, %v1489
        %v1661 = vshrl.u32 %v1489, 16
        %v1662 = vshrl.u32 %v1607, 16
        %v1663 = vpack.i.b16 %v1662, %v1661
        %v1666 = vpack.i.b16 %v1608, %v1490
        %v1667 = vshrl.u32 %v1490, 16
        %v1668 = vshrl.u32 %v1608, 16
        %v1669 = vpack.i.b16 %v1668, %v1667
        %v1672 = vpack.i.b16 %v1609, %v1491
        %v1673 = vshrl.u32 %v1491, 16
        %v1674 = vshrl.u32 %v1609, 16
        %v1675 = vpack.i.b16 %v1674, %v1673
        %v1678 = vpack.i.b16 %v1610, %v1492
        %v1680 = vshrl.u32 %v1492, 16
        %v1681 = vshrl.u32 %v1610, 16
        %v1682 = vpack.i.b16 %v1681, %v1680
        %v1686 = vpack.i.b16 %v1611, %v1493
        %v1688 = vshrl.u32 %v1493, 16
        %v1689 = vshrl.u32 %v1611, 16
        %v1690 = vpack.i.b16 %v1689, %v1688
        %vm1692 = vcmask 64512
        %v1694 = vsel %vm1692, %v1614, 0
        %v1697 = vsel %vm1692, %v1626, 0
        %1699 = vmatprep.subr.bf16.mxu0 0
        %1700 = vmatpush1.bf16.xpose.msra.mxu0 %v1697
        %1701 = vmatprep.subr.bf16.mxu0 0
        %1702 = vmatpush1.bf16.xpose.msra.mxu0 0
        %1703 = vmatprep.subr.bf16.mxu0 0
        %1704 = vmatpush1.bf16.xpose.msra.mxu0 0
        %1705 = vmatprep.subr.bf16.mxu0 0
        %1706 = vmatpush1.bf16.xpose.msra.mxu0 0
        %1707 = vmatprep.subr.bf16.mxu0 0
        %1708 = vmatpush1.bf16.xpose.msra.mxu0 0
        %1709 = vmatprep.subr.bf16.mxu0 0
        %1710 = vmatpush1.bf16.xpose.msra.mxu0 0
        %1711 = vmatprep.subr.bf16.mxu0 0
        %1712 = vmatpush1.bf16.xpose.msra.mxu0 0
        %1713 = vmatprep.subr.bf16.mxu0 0
        %1714 = vmatpush1.bf16.xpose.msra.mxu0 0
        %1715 = vmatprep.subr.bf16.mxu0 0
        %1716 = vmatpush1.bf16.xpose.msra.mxu0 0
        %1717 = vmatprep.subr.bf16.mxu0 0
        %1718 = vmatpush1.bf16.xpose.msra.mxu0 0
        %1719 = vmatprep.subr.bf16.mxu0 0
        %1720 = vmatpush1.bf16.xpose.msra.mxu0 0
        %1721 = vmatprep.subr.bf16.mxu0 0
        %1722 = vmatpush1.bf16.xpose.msra.mxu0 0
        %1723 = vmatprep.subr.bf16.mxu0 0
        %1724 = vmatpush1.bf16.xpose.msra.mxu0 0
        %1725 = vmatprep.subr.bf16.mxu0 0
        %1726 = vmatpush1.bf16.xpose.msra.mxu0 0
        %1727 = vmatprep.subr.bf16.mxu0 0
        %1728 = vmatpush1.bf16.xpose.msra.mxu0 0
        %1729 = vmatprep.subr.bf16.mxu0 0
        %1730 = vmatpush1.bf16.xpose.msra.mxu0 0
        %1731 = vmatprep.mubr.bf16.mxu0 0
        %1732 = vmatmul.mubr.bf16.gmra.mrb[0].mxu0 %v1694
        %v1733 = vpop.f32.mrb[0].mxu0
        %v1734 = vadd.f32 0.0, %v1733
        %v1735 = vpop.f32.mrb[0].mxu0
        %v1736 = vpop.f32.mrb[0].mxu0
        %v1737 = vadd.f32 0.0, %v1736
        %v1738 = vpop.f32.mrb[0].mxu0
        %1739 = vdwg.mxu0
        %v1741 = vsel %vm1692, %v1654, 0
        %v1744 = vsel %vm1692, %v1666, 0
        %1746 = vmatprep.subr.bf16.mxu0 0
        %1747 = vmatpush1.bf16.xpose.msra.mxu0 %v1744
        %1748 = vmatprep.subr.bf16.mxu0 0
        %1749 = vmatpush1.bf16.xpose.msra.mxu0 0
        %1750 = vmatprep.subr.bf16.mxu0 0
        %1751 = vmatpush1.bf16.xpose.msra.mxu0 0
        %1752 = vmatprep.subr.bf16.mxu0 0
        %1753 = vmatpush1.bf16.xpose.msra.mxu0 0
        %1754 = vmatprep.subr.bf16.mxu0 0
        %1755 = vmatpush1.bf16.xpose.msra.mxu0 0
        %1756 = vmatprep.subr.bf16.mxu0 0
        %1757 = vmatpush1.bf16.xpose.msra.mxu0 0
        %1758 = vmatprep.subr.bf16.mxu0 0
        %1759 = vmatpush1.bf16.xpose.msra.mxu0 0
        %1760 = vmatprep.subr.bf16.mxu0 0
        %1761 = vmatpush1.bf16.xpose.msra.mxu0 0
        %1762 = vmatprep.subr.bf16.mxu0 0
        %1763 = vmatpush1.bf16.xpose.msra.mxu0 0
        %1764 = vmatprep.subr.bf16.mxu0 0
        %1765 = vmatpush1.bf16.xpose.msra.mxu0 0
        %1766 = vmatprep.subr.bf16.mxu0 0
        %1767 = vmatpush1.bf16.xpose.msra.mxu0 0
        %1768 = vmatprep.subr.bf16.mxu0 0
        %1769 = vmatpush1.bf16.xpose.msra.mxu0 0
        %1770 = vmatprep.subr.bf16.mxu0 0
        %1771 = vmatpush1.bf16.xpose.msra.mxu0 0
        %1772 = vmatprep.subr.bf16.mxu0 0
        %1773 = vmatpush1.bf16.xpose.msra.mxu0 0
        %1774 = vmatprep.subr.bf16.mxu0 0
        %1775 = vmatpush1.bf16.xpose.msra.mxu0 0
        %1776 = vmatprep.subr.bf16.mxu0 0
        %1777 = vmatpush1.bf16.xpose.msra.mxu0 0
        %1778 = vmatprep.mubr.bf16.mxu0 0
        %1779 = vmatmul.mubr.bf16.gmra.mrb[0].mxu0 %v1741
        %v1780 = vpop.f32.mrb[0].mxu0
        %v1781 = vadd.f32 0.0, %v1780
        %v1782 = vpop.f32.mrb[0].mxu0
        %v1783 = vpop.f32.mrb[0].mxu0
        %v1784 = vadd.f32 0.0, %v1783
        %v1785 = vpop.f32.mrb[0].mxu0
        %1786 = vdwg.mxu0
        %v1788 = vsel %vm1692, %v1617, 0
        %v1791 = vsel %vm1692, %v1629, 0
        %1793 = vmatprep.subr.bf16.mxu0 0
        %1794 = vmatpush1.bf16.xpose.msra.mxu0 %v1791
        %1795 = vmatprep.subr.bf16.mxu0 0
        %1796 = vmatpush1.bf16.xpose.msra.mxu0 0
        %1797 = vmatprep.subr.bf16.mxu0 0
        %1798 = vmatpush1.bf16.xpose.msra.mxu0 0
        %1799 = vmatprep.subr.bf16.mxu0 0
        %1800 = vmatpush1.bf16.xpose.msra.mxu0 0
        %1801 = vmatprep.subr.bf16.mxu0 0
        %1802 = vmatpush1.bf16.xpose.msra.mxu0 0
        %1803 = vmatprep.subr.bf16.mxu0 0
        %1804 = vmatpush1.bf16.xpose.msra.mxu0 0
        %1805 = vmatprep.subr.bf16.mxu0 0
        %1806 = vmatpush1.bf16.xpose.msra.mxu0 0
        %1807 = vmatprep.subr.bf16.mxu0 0
        %1808 = vmatpush1.bf16.xpose.msra.mxu0 0
        %1809 = vmatprep.subr.bf16.mxu0 0
        %1810 = vmatpush1.bf16.xpose.msra.mxu0 0
        %1811 = vmatprep.subr.bf16.mxu0 0
        %1812 = vmatpush1.bf16.xpose.msra.mxu0 0
        %1813 = vmatprep.subr.bf16.mxu0 0
        %1814 = vmatpush1.bf16.xpose.msra.mxu0 0
        %1815 = vmatprep.subr.bf16.mxu0 0
        %1816 = vmatpush1.bf16.xpose.msra.mxu0 0
        %1817 = vmatprep.subr.bf16.mxu0 0
        %1818 = vmatpush1.bf16.xpose.msra.mxu0 0
        %1819 = vmatprep.subr.bf16.mxu0 0
        %1820 = vmatpush1.bf16.xpose.msra.mxu0 0
        %1821 = vmatprep.subr.bf16.mxu0 0
        %1822 = vmatpush1.bf16.xpose.msra.mxu0 0
        %1823 = vmatprep.subr.bf16.mxu0 0
        %1824 = vmatpush1.bf16.xpose.msra.mxu0 0
        %1825 = vmatprep.mubr.bf16.mxu0 0
        %1826 = vmatmul.mubr.bf16.gmra.mrb[0].mxu0 %v1788
        %v1827 = vpop.f32.mrb[0].mxu0
        %v1828 = vadd.f32 0.0, %v1827
        %v1829 = vpop.f32.mrb[0].mxu0
        %v1830 = vpop.f32.mrb[0].mxu0
        %v1831 = vadd.f32 0.0, %v1830
        %v1832 = vpop.f32.mrb[0].mxu0
        %1833 = vdwg.mxu0
        %v1835 = vsel %vm1692, %v1657, 0
        %v1838 = vsel %vm1692, %v1669, 0
        %1840 = vmatprep.subr.bf16.mxu0 0
        %1841 = vmatpush1.bf16.xpose.msra.mxu0 %v1838
        %1842 = vmatprep.subr.bf16.mxu0 0
        %1843 = vmatpush1.bf16.xpose.msra.mxu0 0
        %1844 = vmatprep.subr.bf16.mxu0 0
        %1845 = vmatpush1.bf16.xpose.msra.mxu0 0
        %1846 = vmatprep.subr.bf16.mxu0 0
        %1847 = vmatpush1.bf16.xpose.msra.mxu0 0
        %1848 = vmatprep.subr.bf16.mxu0 0
        %1849 = vmatpush1.bf16.xpose.msra.mxu0 0
        %1850 = vmatprep.subr.bf16.mxu0 0
        %1851 = vmatpush1.bf16.xpose.msra.mxu0 0
        %1852 = vmatprep.subr.bf16.mxu0 0
        %1853 = vmatpush1.bf16.xpose.msra.mxu0 0
        %1854 = vmatprep.subr.bf16.mxu0 0
        %1855 = vmatpush1.bf16.xpose.msra.mxu0 0
        %1856 = vmatprep.subr.bf16.mxu0 0
        %1857 = vmatpush1.bf16.xpose.msra.mxu0 0
        %1858 = vmatprep.subr.bf16.mxu0 0
        %1859 = vmatpush1.bf16.xpose.msra.mxu0 0
        %1860 = vmatprep.subr.bf16.mxu0 0
        %1861 = vmatpush1.bf16.xpose.msra.mxu0 0
        %1862 = vmatprep.subr.bf16.mxu0 0
        %1863 = vmatpush1.bf16.xpose.msra.mxu0 0
        %1864 = vmatprep.subr.bf16.mxu0 0
        %1865 = vmatpush1.bf16.xpose.msra.mxu0 0
        %1866 = vmatprep.subr.bf16.mxu0 0
        %1867 = vmatpush1.bf16.xpose.msra.mxu0 0
        %1868 = vmatprep.subr.bf16.mxu0 0
        %1869 = vmatpush1.bf16.xpose.msra.mxu0 0
        %1870 = vmatprep.subr.bf16.mxu0 0
        %1871 = vmatpush1.bf16.xpose.msra.mxu0 0
        %1872 = vmatprep.mubr.bf16.mxu0 0
        %1873 = vmatmul.mubr.bf16.gmra.mrb[0].mxu0 %v1835
        %v1874 = vpop.f32.mrb[0].mxu0
        %v1875 = vadd.f32 0.0, %v1874
        %v1876 = vpop.f32.mrb[0].mxu0
        %v1877 = vpop.f32.mrb[0].mxu0
        %v1878 = vadd.f32 0.0, %v1877
        %v1879 = vpop.f32.mrb[0].mxu0
        %1880 = vdwg.mxu0
        %v1882 = vsel %vm1692, %v1620, 0
        %v1885 = vsel %vm1692, %v1632, 0
        %1887 = vmatprep.subr.bf16.mxu0 0
        %1888 = vmatpush1.bf16.xpose.msra.mxu0 %v1885
        %1889 = vmatprep.subr.bf16.mxu0 0
        %1890 = vmatpush1.bf16.xpose.msra.mxu0 0
        %1891 = vmatprep.subr.bf16.mxu0 0
        %1892 = vmatpush1.bf16.xpose.msra.mxu0 0
        %1893 = vmatprep.subr.bf16.mxu0 0
        %1894 = vmatpush1.bf16.xpose.msra.mxu0 0
        %1895 = vmatprep.subr.bf16.mxu0 0
        %1896 = vmatpush1.bf16.xpose.msra.mxu0 0
        %1897 = vmatprep.subr.bf16.mxu0 0
        %1898 = vmatpush1.bf16.xpose.msra.mxu0 0
        %1899 = vmatprep.subr.bf16.mxu0 0
        %1900 = vmatpush1.bf16.xpose.msra.mxu0 0
        %1901 = vmatprep.subr.bf16.mxu0 0
        %1902 = vmatpush1.bf16.xpose.msra.mxu0 0
        %1903 = vmatprep.subr.bf16.mxu0 0
        %1904 = vmatpush1.bf16.xpose.msra.mxu0 0
        %1905 = vmatprep.subr.bf16.mxu0 0
        %1906 = vmatpush1.bf16.xpose.msra.mxu0 0
        %1907 = vmatprep.subr.bf16.mxu0 0
        %1908 = vmatpush1.bf16.xpose.msra.mxu0 0
        %1909 = vmatprep.subr.bf16.mxu0 0
        %1910 = vmatpush1.bf16.xpose.msra.mxu0 0
        %1911 = vmatprep.subr.bf16.mxu0 0
        %1912 = vmatpush1.bf16.xpose.msra.mxu0 0
        %1913 = vmatprep.subr.bf16.mxu0 0
        %1914 = vmatpush1.bf16.xpose.msra.mxu0 0
        %1915 = vmatprep.subr.bf16.mxu0 0
        %1916 = vmatpush1.bf16.xpose.msra.mxu0 0
        %1917 = vmatprep.subr.bf16.mxu0 0
        %1918 = vmatpush1.bf16.xpose.msra.mxu0 0
        %1919 = vmatprep.mubr.bf16.mxu0 0
        %1920 = vmatmul.mubr.bf16.gmra.mrb[0].mxu0 %v1882
        %v1921 = vpop.f32.mrb[0].mxu0
        %v1922 = vadd.f32 0.0, %v1921
        %v1923 = vpop.f32.mrb[0].mxu0
        %v1924 = vpop.f32.mrb[0].mxu0
        %v1925 = vadd.f32 0.0, %v1924
        %v1926 = vpop.f32.mrb[0].mxu0
        %1927 = vdwg.mxu0
        %v1929 = vsel %vm1692, %v1660, 0
        %v1932 = vsel %vm1692, %v1672, 0
        %1934 = vmatprep.subr.bf16.mxu0 0
        %1935 = vmatpush1.bf16.xpose.msra.mxu0 %v1932
        %1936 = vmatprep.subr.bf16.mxu0 0
        %1937 = vmatpush1.bf16.xpose.msra.mxu0 0
        %1938 = vmatprep.subr.bf16.mxu0 0
        %1939 = vmatpush1.bf16.xpose.msra.mxu0 0
        %1940 = vmatprep.subr.bf16.mxu0 0
        %1941 = vmatpush1.bf16.xpose.msra.mxu0 0
        %1942 = vmatprep.subr.bf16.mxu0 0
        %1943 = vmatpush1.bf16.xpose.msra.mxu0 0
        %1944 = vmatprep.subr.bf16.mxu0 0
        %1945 = vmatpush1.bf16.xpose.msra.mxu0 0
        %1946 = vmatprep.subr.bf16.mxu0 0
        %1947 = vmatpush1.bf16.xpose.msra.mxu0 0
        %1948 = vmatprep.subr.bf16.mxu0 0
        %1949 = vmatpush1.bf16.xpose.msra.mxu0 0
        %1950 = vmatprep.subr.bf16.mxu0 0
        %1951 = vmatpush1.bf16.xpose.msra.mxu0 0
        %1952 = vmatprep.subr.bf16.mxu0 0
        %1953 = vmatpush1.bf16.xpose.msra.mxu0 0
        %1954 = vmatprep.subr.bf16.mxu0 0
        %1955 = vmatpush1.bf16.xpose.msra.mxu0 0
        %1956 = vmatprep.subr.bf16.mxu0 0
        %1957 = vmatpush1.bf16.xpose.msra.mxu0 0
        %1958 = vmatprep.subr.bf16.mxu0 0
        %1959 = vmatpush1.bf16.xpose.msra.mxu0 0
        %1960 = vmatprep.subr.bf16.mxu0 0
        %1961 = vmatpush1.bf16.xpose.msra.mxu0 0
        %1962 = vmatprep.subr.bf16.mxu0 0
        %1963 = vmatpush1.bf16.xpose.msra.mxu0 0
        %1964 = vmatprep.subr.bf16.mxu0 0
        %1965 = vmatpush1.bf16.xpose.msra.mxu0 0
        %1966 = vmatprep.mubr.bf16.mxu0 0
        %1967 = vmatmul.mubr.bf16.gmra.mrb[0].mxu0 %v1929
        %v1968 = vpop.f32.mrb[0].mxu0
        %v1969 = vadd.f32 0.0, %v1968
        %v1970 = vpop.f32.mrb[0].mxu0
        %v1971 = vpop.f32.mrb[0].mxu0
        %v1972 = vadd.f32 0.0, %v1971
        %v1973 = vpop.f32.mrb[0].mxu0
        %1974 = vdwg.mxu0
        %v1976 = vsel %vm1692, %v1623, 0
        %v1979 = vsel %vm1692, %v1635, 0
        %1981 = vmatprep.subr.bf16.mxu0 0
        %1982 = vmatpush1.bf16.xpose.msra.mxu0 %v1979
        %1983 = vmatprep.subr.bf16.mxu0 0
        %1984 = vmatpush1.bf16.xpose.msra.mxu0 0
        %1985 = vmatprep.subr.bf16.mxu0 0
        %1986 = vmatpush1.bf16.xpose.msra.mxu0 0
        %1987 = vmatprep.subr.bf16.mxu0 0
        %1988 = vmatpush1.bf16.xpose.msra.mxu0 0
        %1989 = vmatprep.subr.bf16.mxu0 0
        %1990 = vmatpush1.bf16.xpose.msra.mxu0 0
        %1991 = vmatprep.subr.bf16.mxu0 0
        %1992 = vmatpush1.bf16.xpose.msra.mxu0 0
        %1993 = vmatprep.subr.bf16.mxu0 0
        %1994 = vmatpush1.bf16.xpose.msra.mxu0 0
        %1995 = vmatprep.subr.bf16.mxu0 0
        %1996 = vmatpush1.bf16.xpose.msra.mxu0 0
        %1997 = vmatprep.subr.bf16.mxu0 0
        %1998 = vmatpush1.bf16.xpose.msra.mxu0 0
        %1999 = vmatprep.subr.bf16.mxu0 0
        %2000 = vmatpush1.bf16.xpose.msra.mxu0 0
        %2001 = vmatprep.subr.bf16.mxu0 0
        %2002 = vmatpush1.bf16.xpose.msra.mxu0 0
        %2003 = vmatprep.subr.bf16.mxu0 0
        %2004 = vmatpush1.bf16.xpose.msra.mxu0 0
        %2005 = vmatprep.subr.bf16.mxu0 0
        %2006 = vmatpush1.bf16.xpose.msra.mxu0 0
        %2007 = vmatprep.subr.bf16.mxu0 0
        %2008 = vmatpush1.bf16.xpose.msra.mxu0 0
        %2009 = vmatprep.subr.bf16.mxu0 0
        %2010 = vmatpush1.bf16.xpose.msra.mxu0 0
        %2011 = vmatprep.subr.bf16.mxu0 0
        %2012 = vmatpush1.bf16.xpose.msra.mxu0 0
        %2013 = vmatprep.mubr.bf16.mxu0 0
        %2014 = vmatmul.mubr.bf16.gmra.mrb[0].mxu0 %v1976
        %v2015 = vpop.f32.mrb[0].mxu0
        %v2016 = vadd.f32 0.0, %v2015
        %v2017 = vpop.f32.mrb[0].mxu0
        %v2018 = vpop.f32.mrb[0].mxu0
        %v2019 = vadd.f32 0.0, %v2018
        %v2020 = vpop.f32.mrb[0].mxu0
        %2021 = vdwg.mxu0
        %v2023 = vsel %vm1692, %v1663, 0
        %v2026 = vsel %vm1692, %v1675, 0
        %2028 = vmatprep.subr.bf16.mxu0 0
        %2029 = vmatpush1.bf16.xpose.msra.mxu0 %v2026
        %2030 = vmatprep.subr.bf16.mxu0 0
        %2031 = vmatpush1.bf16.xpose.msra.mxu0 0
        %2032 = vmatprep.subr.bf16.mxu0 0
        %2033 = vmatpush1.bf16.xpose.msra.mxu0 0
        %2034 = vmatprep.subr.bf16.mxu0 0
        %2035 = vmatpush1.bf16.xpose.msra.mxu0 0
        %2036 = vmatprep.subr.bf16.mxu0 0
        %2037 = vmatpush1.bf16.xpose.msra.mxu0 0
        %2038 = vmatprep.subr.bf16.mxu0 0
        %2039 = vmatpush1.bf16.xpose.msra.mxu0 0
        %2040 = vmatprep.subr.bf16.mxu0 0
        %2041 = vmatpush1.bf16.xpose.msra.mxu0 0
        %2042 = vmatprep.subr.bf16.mxu0 0
        %2043 = vmatpush1.bf16.xpose.msra.mxu0 0
        %2044 = vmatprep.subr.bf16.mxu0 0
        %2045 = vmatpush1.bf16.xpose.msra.mxu0 0
        %2046 = vmatprep.subr.bf16.mxu0 0
        %2047 = vmatpush1.bf16.xpose.msra.mxu0 0
        %2048 = vmatprep.subr.bf16.mxu0 0
        %2049 = vmatpush1.bf16.xpose.msra.mxu0 0
        %2050 = vmatprep.subr.bf16.mxu0 0
        %2051 = vmatpush1.bf16.xpose.msra.mxu0 0
        %2052 = vmatprep.subr.bf16.mxu0 0
        %2053 = vmatpush1.bf16.xpose.msra.mxu0 0
        %2054 = vmatprep.subr.bf16.mxu0 0
        %2055 = vmatpush1.bf16.xpose.msra.mxu0 0
        %2056 = vmatprep.subr.bf16.mxu0 0
        %2057 = vmatpush1.bf16.xpose.msra.mxu0 0
        %2058 = vmatprep.subr.bf16.mxu0 0
        %2059 = vmatpush1.bf16.xpose.msra.mxu0 0
        %2060 = vmatprep.mubr.bf16.mxu0 0
        %2061 = vmatmul.mubr.bf16.gmra.mrb[0].mxu0 %v2023
        %v2062 = vpop.f32.mrb[0].mxu0
        %v2063 = vadd.f32 0.0, %v2062
        %v2064 = vpop.f32.mrb[0].mxu0
        %v2065 = vpop.f32.mrb[0].mxu0
        %v2066 = vadd.f32 0.0, %v2065
        %v2067 = vpop.f32.mrb[0].mxu0
        %2068 = vdwg.mxu0
        %v2069 = vld [vmem:[#allocation8] sm:$0xff]
        %v2070 = vld [vmem:[#allocation8 + $0x8] sm:$0xff]
        %v2071 = vld [vmem:[#allocation8 + $0x10] sm:$0xff]
        %v2072 = vld [vmem:[#allocation8 + $0x18] sm:$0xff]
        %v2073 = vld [vmem:[#allocation8 + $0x20] sm:$0xff]
        %v2074 = vld [vmem:[#allocation8 + $0x28] sm:$0xff]
        %v2075 = vld [vmem:[#allocation8 + $0x30] sm:$0xff]
        %v2076 = vld [vmem:[#allocation8 + $0x38] sm:$0xff]
        %v2077 = vadd.f32 %v1734, %v2069
        %v2078 = vadd.f32 %v1737, %v2070
        %v2079 = vadd.f32 %v1781, %v2069
        %v2080 = vadd.f32 %v1784, %v2070
        %v2081 = vadd.f32 %v1828, %v2071
        %v2082 = vadd.f32 %v1831, %v2072
        %v2083 = vadd.f32 %v1875, %v2071
        %v2084 = vadd.f32 %v1878, %v2072
        %v2085 = vadd.f32 %v1922, %v2073
        %v2086 = vadd.f32 %v1925, %v2074
        %v2087 = vadd.f32 %v1969, %v2073
        %v2088 = vadd.f32 %v1972, %v2074
        %v2089 = vadd.f32 %v2016, %v2075
        %v2090 = vadd.f32 %v2019, %v2076
        %v2091 = vadd.f32 %v2063, %v2075
        %v2092 = vadd.f32 %v2066, %v2076
        %vm2093 = vcmask 130048
        %v2094 = vsel %vm2093, %v2077, -inf
        %2095 = vmax.xlane.f32.xlu0 %v2094
        %v2096 = vpop.xlane.xlu0 %2095
        %v2097 = vsel %vm2093, %v2078, -inf
        %2098 = vmax.xlane.f32.xlu0 %v2097
        %v2099 = vpop.xlane.xlu0 %2098
        %v2100 = vsel %vm2093, %v2079, -inf
        %2101 = vmax.xlane.f32.xlu0 %v2100
        %v2102 = vpop.xlane.xlu0 %2101
        %v2103 = vsel %vm2093, %v2080, -inf
        %2104 = vmax.xlane.f32.xlu0 %v2103
        %v2105 = vpop.xlane.xlu0 %2104
        %v2106 = vsel %vm2093, %v2081, -inf
        %2107 = vmax.xlane.f32.xlu0 %v2106
        %v2108 = vpop.xlane.xlu0 %2107
        %v2109 = vsel %vm2093, %v2082, -inf
        %2110 = vmax.xlane.f32.xlu0 %v2109
        %v2111 = vpop.xlane.xlu0 %2110
        %v2112 = vsel %vm2093, %v2083, -inf
        %2113 = vmax.xlane.f32.xlu0 %v2112
        %v2114 = vpop.xlane.xlu0 %2113
        %v2115 = vsel %vm2093, %v2084, -inf
        %2116 = vmax.xlane.f32.xlu0 %v2115
        %v2117 = vpop.xlane.xlu0 %2116
        %v2118 = vsel %vm2093, %v2085, -inf
        %2119 = vmax.xlane.f32.xlu0 %v2118
        %v2120 = vpop.xlane.xlu0 %2119
        %v2121 = vsel %vm2093, %v2086, -inf
        %2122 = vmax.xlane.f32.xlu0 %v2121
        %v2123 = vpop.xlane.xlu0 %2122
        %v2124 = vsel %vm2093, %v2087, -inf
        %2125 = vmax.xlane.f32.xlu0 %v2124
        %v2126 = vpop.xlane.xlu0 %2125
        %v2127 = vsel %vm2093, %v2088, -inf
        %2128 = vmax.xlane.f32.xlu0 %v2127
        %v2129 = vpop.xlane.xlu0 %2128
        %v2130 = vsel %vm2093, %v2089, -inf
        %2131 = vmax.xlane.f32.xlu0 %v2130
        %v2132 = vpop.xlane.xlu0 %2131
        %v2133 = vsel %vm2093, %v2090, -inf
        %2134 = vmax.xlane.f32.xlu0 %v2133
        %v2135 = vpop.xlane.xlu0 %2134
        %v2136 = vsel %vm2093, %v2091, -inf
        %2137 = vmax.xlane.f32.xlu0 %v2136
        %v2138 = vpop.xlane.xlu0 %2137
        %v2139 = vsel %vm2093, %v2092, -inf
        %2140 = vmax.xlane.f32.xlu0 %v2139
        %v2141 = vpop.xlane.xlu0 %2140
        %v2142 = vsub.f32 %v2077, %v2096
        %v2143 = vsub.f32 %v2078, %v2099
        %v2144 = vsub.f32 %v2079, %v2102
        %v2145 = vsub.f32 %v2080, %v2105
        %v2146 = vsub.f32 %v2081, %v2108
        %v2147 = vsub.f32 %v2082, %v2111
        %v2148 = vsub.f32 %v2083, %v2114
        %v2149 = vsub.f32 %v2084, %v2117
        %v2150 = vsub.f32 %v2085, %v2120
        %v2151 = vsub.f32 %v2086, %v2123
        %v2152 = vsub.f32 %v2087, %v2126
        %v2153 = vsub.f32 %v2088, %v2129
        %v2154 = vsub.f32 %v2089, %v2132
        %v2155 = vsub.f32 %v2090, %v2135
        %v2156 = vsub.f32 %v2091, %v2138
        %v2157 = vsub.f32 %v2092, %v2141
        %v2158 = vmul.f32 %v2142, 1.442695
        %v2159 = vpow.pop %v2158
        %v2160 = vmul.f32 %v2143, 1.442695
        %v2161 = vpow.pop %v2160
        %v2162 = vmul.f32 %v2144, 1.442695
        %v2163 = vpow.pop %v2162
        %v2164 = vmul.f32 %v2145, 1.442695
        %v2165 = vpow.pop %v2164
        %v2166 = vmul.f32 %v2146, 1.442695
        %v2167 = vpow.pop %v2166
        %v2168 = vmul.f32 %v2147, 1.442695
        %v2169 = vpow.pop %v2168
        %v2170 = vmul.f32 %v2148, 1.442695
        %v2171 = vpow.pop %v2170
        %v2172 = vmul.f32 %v2149, 1.442695
        %v2173 = vpow.pop %v2172
        %v2174 = vmul.f32 %v2150, 1.442695
        %v2175 = vpow.pop %v2174
        %v2176 = vmul.f32 %v2151, 1.442695
        %v2177 = vpow.pop %v2176
        %v2178 = vmul.f32 %v2152, 1.442695
        %v2179 = vpow.pop %v2178
        %v2180 = vmul.f32 %v2153, 1.442695
        %v2181 = vpow.pop %v2180
        %v2182 = vmul.f32 %v2154, 1.442695
        %v2183 = vpow.pop %v2182
        %v2184 = vmul.f32 %v2155, 1.442695
        %v2185 = vpow.pop %v2184
        %v2186 = vmul.f32 %v2156, 1.442695
        %v2187 = vpow.pop %v2186
        %v2188 = vmul.f32 %v2157, 1.442695
        %v2189 = vpow.pop %v2188
        %v2190 = vsel %vm2093, %v2159, 0.0
        %2191 = vadd.xlane.f32.xlu0 %v2190
        %v2192 = vpop.xlane.xlu0 %2191
        %v2193 = vsel %vm2093, %v2161, 0.0
        %2194 = vadd.xlane.f32.xlu0 %v2193
        %v2195 = vpop.xlane.xlu0 %2194
        %v2196 = vsel %vm2093, %v2163, 0.0
        %2197 = vadd.xlane.f32.xlu0 %v2196
        %v2198 = vpop.xlane.xlu0 %2197
        %v2199 = vsel %vm2093, %v2165, 0.0
        %2200 = vadd.xlane.f32.xlu0 %v2199
        %v2201 = vpop.xlane.xlu0 %2200
        %v2202 = vsel %vm2093, %v2167, 0.0
        %2203 = vadd.xlane.f32.xlu0 %v2202
        %v2204 = vpop.xlane.xlu0 %2203
        %v2205 = vsel %vm2093, %v2169, 0.0
        %2206 = vadd.xlane.f32.xlu0 %v2205
        %v2207 = vpop.xlane.xlu0 %2206
        %v2208 = vsel %vm2093, %v2171, 0.0
        %2209 = vadd.xlane.f32.xlu0 %v2208
        %v2210 = vpop.xlane.xlu0 %2209
        %v2211 = vsel %vm2093, %v2173, 0.0
        %2212 = vadd.xlane.f32.xlu0 %v2211
        %v2213 = vpop.xlane.xlu0 %2212
        %v2214 = vsel %vm2093, %v2175, 0.0
        %2215 = vadd.xlane.f32.xlu0 %v2214
        %v2216 = vpop.xlane.xlu0 %2215
        %v2217 = vsel %vm2093, %v2177, 0.0
        %2218 = vadd.xlane.f32.xlu0 %v2217
        %v2219 = vpop.xlane.xlu0 %2218
        %v2220 = vsel %vm2093, %v2179, 0.0
        %2221 = vadd.xlane.f32.xlu0 %v2220
        %v2222 = vpop.xlane.xlu0 %2221
        %v2223 = vsel %vm2093, %v2181, 0.0
        %2224 = vadd.xlane.f32.xlu0 %v2223
        %v2225 = vpop.xlane.xlu0 %2224
        %v2226 = vsel %vm2093, %v2183, 0.0
        %2227 = vadd.xlane.f32.xlu0 %v2226
        %v2228 = vpop.xlane.xlu0 %2227
        %v2229 = vsel %vm2093, %v2185, 0.0
        %2230 = vadd.xlane.f32.xlu0 %v2229
        %v2231 = vpop.xlane.xlu0 %2230
        %v2232 = vsel %vm2093, %v2187, 0.0
        %2233 = vadd.xlane.f32.xlu0 %v2232
        %v2234 = vpop.xlane.xlu0 %2233
        %v2235 = vsel %vm2093, %v2189, 0.0
        %2236 = vadd.xlane.f32.xlu0 %v2235
        %v2237 = vpop.xlane.xlu0 %2236
        %v2238 = vrcp.pop %v2192
        %v2239 = vrcp.pop %v2195
        %v2240 = vrcp.pop %v2198
        %v2241 = vrcp.pop %v2201
        %v2242 = vrcp.pop %v2204
        %v2243 = vrcp.pop %v2207
        %v2244 = vrcp.pop %v2210
        %v2245 = vrcp.pop %v2213
        %v2246 = vrcp.pop %v2216
        %v2247 = vrcp.pop %v2219
        %v2248 = vrcp.pop %v2222
        %v2249 = vrcp.pop %v2225
        %v2250 = vrcp.pop %v2228
        %v2251 = vrcp.pop %v2231
        %v2252 = vrcp.pop %v2234
        %v2253 = vrcp.pop %v2237
        %v2254 = vmul.f32 %v2159, %v2238
        %v2255 = vmul.f32 %v2161, %v2239
        %v2256 = vmul.f32 %v2163, %v2240
        %v2257 = vmul.f32 %v2165, %v2241
        %v2258 = vmul.f32 %v2167, %v2242
        %v2259 = vmul.f32 %v2169, %v2243
        %v2260 = vmul.f32 %v2171, %v2244
        %v2261 = vmul.f32 %v2173, %v2245
        %v2262 = vmul.f32 %v2175, %v2246
        %v2263 = vmul.f32 %v2177, %v2247
        %v2264 = vmul.f32 %v2179, %v2248
        %v2265 = vmul.f32 %v2181, %v2249
        %v2266 = vmul.f32 %v2183, %v2250
        %v2267 = vmul.f32 %v2185, %v2251
        %v2268 = vmul.f32 %v2187, %v2252
        %v2269 = vmul.f32 %v2189, %v2253
        %v2270 = vpack.c.bf16 %v2255, %v2254
        %v2271 = vpack.c.bf16 %v2257, %v2256
        %v2272 = vpack.c.bf16 %v2259, %v2258
        %v2273 = vpack.c.bf16 %v2261, %v2260
        %v2274 = vpack.c.bf16 %v2263, %v2262
        %v2275 = vpack.c.bf16 %v2265, %v2264
        %v2276 = vpack.c.bf16 %v2267, %v2266
        %v2277 = vpack.c.bf16 %v2269, %v2268
        %v2279 = vsel %vm2093, %v2270, 0
        %2281 = vmatprep.subr.bf16.mxu0 0
        %2282 = vmatpush1.bf16.msra.mxu0 %v1638
        %2283 = vmatprep.subr.bf16.mxu0 0
        %2284 = vmatpush1.bf16.msra.mxu0 0
        %2285 = vmatprep.subr.bf16.mxu0 0
        %2286 = vmatpush1.bf16.msra.mxu0 0
        %2287 = vmatprep.subr.bf16.mxu0 0
        %2288 = vmatpush1.bf16.msra.mxu0 0
        %2289 = vmatprep.subr.bf16.mxu0 0
        %2290 = vmatpush1.bf16.msra.mxu0 0
        %2291 = vmatprep.subr.bf16.mxu0 0
        %2292 = vmatpush1.bf16.msra.mxu0 0
        %2293 = vmatprep.subr.bf16.mxu0 0
        %2294 = vmatpush1.bf16.msra.mxu0 0
        %2295 = vmatprep.subr.bf16.mxu0 0
        %2296 = vmatpush1.bf16.msra.mxu0 0
        %2297 = vmatprep.subr.bf16.mxu0 0
        %2298 = vmatpush1.bf16.msra.mxu0 0
        %2299 = vmatprep.subr.bf16.mxu0 0
        %2300 = vmatpush1.bf16.msra.mxu0 0
        %2301 = vmatprep.subr.bf16.mxu0 0
        %2302 = vmatpush1.bf16.msra.mxu0 0
        %2303 = vmatprep.subr.bf16.mxu0 0
        %2304 = vmatpush1.bf16.msra.mxu0 0
        %2305 = vmatprep.subr.bf16.mxu0 0
        %2306 = vmatpush1.bf16.msra.mxu0 0
        %2307 = vmatprep.subr.bf16.mxu0 0
        %2308 = vmatpush1.bf16.msra.mxu0 0
        %2309 = vmatprep.subr.bf16.mxu0 0
        %2310 = vmatpush1.bf16.msra.mxu0 0
        %2311 = vmatprep.subr.bf16.mxu0 0
        %2312 = vmatpush1.bf16.msra.mxu0 0
        %2313 = vmatprep.mubr.bf16.mxu0 0
        %2314 = vmatmul.mubr.bf16.gmra.mrb[0].mxu0 %v2279
        %v2315 = vpop.f32.mrb[0].mxu0
        %v2316 = vadd.f32 0.0, %v2315
        %v2317 = vpop.f32.mrb[0].mxu0
        %v2318 = vpop.f32.mrb[0].mxu0
        %v2319 = vadd.f32 0.0, %v2318
        %v2320 = vpop.f32.mrb[0].mxu0
        %2321 = vdwg.mxu0
        %v2323 = vsel %vm2093, %v2271, 0
        %2325 = vmatprep.subr.bf16.mxu0 0
        %2326 = vmatpush1.bf16.msra.mxu0 %v1678
        %2327 = vmatprep.subr.bf16.mxu0 0
        %2328 = vmatpush1.bf16.msra.mxu0 0
        %2329 = vmatprep.subr.bf16.mxu0 0
        %2330 = vmatpush1.bf16.msra.mxu0 0
        %2331 = vmatprep.subr.bf16.mxu0 0
        %2332 = vmatpush1.bf16.msra.mxu0 0
        %2333 = vmatprep.subr.bf16.mxu0 0
        %2334 = vmatpush1.bf16.msra.mxu0 0
        %2335 = vmatprep.subr.bf16.mxu0 0
        %2336 = vmatpush1.bf16.msra.mxu0 0
        %2337 = vmatprep.subr.bf16.mxu0 0
        %2338 = vmatpush1.bf16.msra.mxu0 0
        %2339 = vmatprep.subr.bf16.mxu0 0
        %2340 = vmatpush1.bf16.msra.mxu0 0
        %2341 = vmatprep.subr.bf16.mxu0 0
        %2342 = vmatpush1.bf16.msra.mxu0 0
        %2343 = vmatprep.subr.bf16.mxu0 0
        %2344 = vmatpush1.bf16.msra.mxu0 0
        %2345 = vmatprep.subr.bf16.mxu0 0
        %2346 = vmatpush1.bf16.msra.mxu0 0
        %2347 = vmatprep.subr.bf16.mxu0 0
        %2348 = vmatpush1.bf16.msra.mxu0 0
        %2349 = vmatprep.subr.bf16.mxu0 0
        %2350 = vmatpush1.bf16.msra.mxu0 0
        %2351 = vmatprep.subr.bf16.mxu0 0
        %2352 = vmatpush1.bf16.msra.mxu0 0
        %2353 = vmatprep.subr.bf16.mxu0 0
        %2354 = vmatpush1.bf16.msra.mxu0 0
        %2355 = vmatprep.subr.bf16.mxu0 0
        %2356 = vmatpush1.bf16.msra.mxu0 0
        %2357 = vmatprep.mubr.bf16.mxu0 0
        %2358 = vmatmul.mubr.bf16.gmra.mrb[0].mxu0 %v2323
        %v2359 = vpop.f32.mrb[0].mxu0
        %v2360 = vadd.f32 0.0, %v2359
        %v2361 = vpop.f32.mrb[0].mxu0
        %v2362 = vpop.f32.mrb[0].mxu0
        %v2363 = vadd.f32 0.0, %v2362
        %v2364 = vpop.f32.mrb[0].mxu0
        %2365 = vdwg.mxu0
        %v2367 = vsel %vm2093, %v2272, 0
        %2369 = vmatprep.subr.bf16.mxu0 0
        %2370 = vmatpush1.bf16.msra.mxu0 %v1642
        %2371 = vmatprep.subr.bf16.mxu0 0
        %2372 = vmatpush1.bf16.msra.mxu0 0
        %2373 = vmatprep.subr.bf16.mxu0 0
        %2374 = vmatpush1.bf16.msra.mxu0 0
        %2375 = vmatprep.subr.bf16.mxu0 0
        %2376 = vmatpush1.bf16.msra.mxu0 0
        %2377 = vmatprep.subr.bf16.mxu0 0
        %2378 = vmatpush1.bf16.msra.mxu0 0
        %2379 = vmatprep.subr.bf16.mxu0 0
        %2380 = vmatpush1.bf16.msra.mxu0 0
        %2381 = vmatprep.subr.bf16.mxu0 0
        %2382 = vmatpush1.bf16.msra.mxu0 0
        %2383 = vmatprep.subr.bf16.mxu0 0
        %2384 = vmatpush1.bf16.msra.mxu0 0
        %2385 = vmatprep.subr.bf16.mxu0 0
        %2386 = vmatpush1.bf16.msra.mxu0 0
        %2387 = vmatprep.subr.bf16.mxu0 0
        %2388 = vmatpush1.bf16.msra.mxu0 0
        %2389 = vmatprep.subr.bf16.mxu0 0
        %2390 = vmatpush1.bf16.msra.mxu0 0
        %2391 = vmatprep.subr.bf16.mxu0 0
        %2392 = vmatpush1.bf16.msra.mxu0 0
        %2393 = vmatprep.subr.bf16.mxu0 0
        %2394 = vmatpush1.bf16.msra.mxu0 0
        %2395 = vmatprep.subr.bf16.mxu0 0
        %2396 = vmatpush1.bf16.msra.mxu0 0
        %2397 = vmatprep.subr.bf16.mxu0 0
        %2398 = vmatpush1.bf16.msra.mxu0 0
        %2399 = vmatprep.subr.bf16.mxu0 0
        %2400 = vmatpush1.bf16.msra.mxu0 0
        %2401 = vmatprep.mubr.bf16.mxu0 0
        %2402 = vmatmul.mubr.bf16.gmra.mrb[0].mxu0 %v2367
        %v2403 = vpop.f32.mrb[0].mxu0
        %v2404 = vadd.f32 0.0, %v2403
        %v2405 = vpop.f32.mrb[0].mxu0
        %v2406 = vpop.f32.mrb[0].mxu0
        %v2407 = vadd.f32 0.0, %v2406
        %v2408 = vpop.f32.mrb[0].mxu0
        %2409 = vdwg.mxu0
        %v2411 = vsel %vm2093, %v2273, 0
        %2413 = vmatprep.subr.bf16.mxu0 0
        %2414 = vmatpush1.bf16.msra.mxu0 %v1682
        %2415 = vmatprep.subr.bf16.mxu0 0
        %2416 = vmatpush1.bf16.msra.mxu0 0
        %2417 = vmatprep.subr.bf16.mxu0 0
        %2418 = vmatpush1.bf16.msra.mxu0 0
        %2419 = vmatprep.subr.bf16.mxu0 0
        %2420 = vmatpush1.bf16.msra.mxu0 0
        %2421 = vmatprep.subr.bf16.mxu0 0
        %2422 = vmatpush1.bf16.msra.mxu0 0
        %2423 = vmatprep.subr.bf16.mxu0 0
        %2424 = vmatpush1.bf16.msra.mxu0 0
        %2425 = vmatprep.subr.bf16.mxu0 0
        %2426 = vmatpush1.bf16.msra.mxu0 0
        %2427 = vmatprep.subr.bf16.mxu0 0
        %2428 = vmatpush1.bf16.msra.mxu0 0
        %2429 = vmatprep.subr.bf16.mxu0 0
        %2430 = vmatpush1.bf16.msra.mxu0 0
        %2431 = vmatprep.subr.bf16.mxu0 0
        %2432 = vmatpush1.bf16.msra.mxu0 0
        %2433 = vmatprep.subr.bf16.mxu0 0
        %2434 = vmatpush1.bf16.msra.mxu0 0
        %2435 = vmatprep.subr.bf16.mxu0 0
        %2436 = vmatpush1.bf16.msra.mxu0 0
        %2437 = vmatprep.subr.bf16.mxu0 0
        %2438 = vmatpush1.bf16.msra.mxu0 0
        %2439 = vmatprep.subr.bf16.mxu0 0
        %2440 = vmatpush1.bf16.msra.mxu0 0
        %2441 = vmatprep.subr.bf16.mxu0 0
        %2442 = vmatpush1.bf16.msra.mxu0 0
        %2443 = vmatprep.subr.bf16.mxu0 0
        %2444 = vmatpush1.bf16.msra.mxu0 0
        %2445 = vmatprep.mubr.bf16.mxu0 0
        %2446 = vmatmul.mubr.bf16.gmra.mrb[0].mxu0 %v2411
        %v2447 = vpop.f32.mrb[0].mxu0
        %v2448 = vadd.f32 0.0, %v2447
        %v2449 = vpop.f32.mrb[0].mxu0
        %v2450 = vpop.f32.mrb[0].mxu0
        %v2451 = vadd.f32 0.0, %v2450
        %v2452 = vpop.f32.mrb[0].mxu0
        %2453 = vdwg.mxu0
        %v2455 = vsel %vm2093, %v2274, 0
        %2457 = vmatprep.subr.bf16.mxu0 0
        %2458 = vmatpush1.bf16.msra.mxu0 %v1646
        %2459 = vmatprep.subr.bf16.mxu0 0
        %2460 = vmatpush1.bf16.msra.mxu0 0
        %2461 = vmatprep.subr.bf16.mxu0 0
        %2462 = vmatpush1.bf16.msra.mxu0 0
        %2463 = vmatprep.subr.bf16.mxu0 0
        %2464 = vmatpush1.bf16.msra.mxu0 0
        %2465 = vmatprep.subr.bf16.mxu0 0
        %2466 = vmatpush1.bf16.msra.mxu0 0
        %2467 = vmatprep.subr.bf16.mxu0 0
        %2468 = vmatpush1.bf16.msra.mxu0 0
        %2469 = vmatprep.subr.bf16.mxu0 0
        %2470 = vmatpush1.bf16.msra.mxu0 0
        %2471 = vmatprep.subr.bf16.mxu0 0
        %2472 = vmatpush1.bf16.msra.mxu0 0
        %2473 = vmatprep.subr.bf16.mxu0 0
        %2474 = vmatpush1.bf16.msra.mxu0 0
        %2475 = vmatprep.subr.bf16.mxu0 0
        %2476 = vmatpush1.bf16.msra.mxu0 0
        %2477 = vmatprep.subr.bf16.mxu0 0
        %2478 = vmatpush1.bf16.msra.mxu0 0
        %2479 = vmatprep.subr.bf16.mxu0 0
        %2480 = vmatpush1.bf16.msra.mxu0 0
        %2481 = vmatprep.subr.bf16.mxu0 0
        %2482 = vmatpush1.bf16.msra.mxu0 0
        %2483 = vmatprep.subr.bf16.mxu0 0
        %2484 = vmatpush1.bf16.msra.mxu0 0
        %2485 = vmatprep.subr.bf16.mxu0 0
        %2486 = vmatpush1.bf16.msra.mxu0 0
        %2487 = vmatprep.subr.bf16.mxu0 0
        %2488 = vmatpush1.bf16.msra.mxu0 0
        %2489 = vmatprep.mubr.bf16.mxu0 0
        %2490 = vmatmul.mubr.bf16.gmra.mrb[0].mxu0 %v2455
        %v2491 = vpop.f32.mrb[0].mxu0
        %v2492 = vadd.f32 0.0, %v2491
        %v2493 = vpop.f32.mrb[0].mxu0
        %v2494 = vpop.f32.mrb[0].mxu0
        %v2495 = vadd.f32 0.0, %v2494
        %v2496 = vpop.f32.mrb[0].mxu0
        %2497 = vdwg.mxu0
        %v2499 = vsel %vm2093, %v2275, 0
        %2501 = vmatprep.subr.bf16.mxu0 0
        %2502 = vmatpush1.bf16.msra.mxu0 %v1686
        %2503 = vmatprep.subr.bf16.mxu0 0
        %2504 = vmatpush1.bf16.msra.mxu0 0
        %2505 = vmatprep.subr.bf16.mxu0 0
        %2506 = vmatpush1.bf16.msra.mxu0 0
        %2507 = vmatprep.subr.bf16.mxu0 0
        %2508 = vmatpush1.bf16.msra.mxu0 0
        %2509 = vmatprep.subr.bf16.mxu0 0
        %2510 = vmatpush1.bf16.msra.mxu0 0
        %2511 = vmatprep.subr.bf16.mxu0 0
        %2512 = vmatpush1.bf16.msra.mxu0 0
        %2513 = vmatprep.subr.bf16.mxu0 0
        %2514 = vmatpush1.bf16.msra.mxu0 0
        %2515 = vmatprep.subr.bf16.mxu0 0
        %2516 = vmatpush1.bf16.msra.mxu0 0
        %2517 = vmatprep.subr.bf16.mxu0 0
        %2518 = vmatpush1.bf16.msra.mxu0 0
        %2519 = vmatprep.subr.bf16.mxu0 0
        %2520 = vmatpush1.bf16.msra.mxu0 0
        %2521 = vmatprep.subr.bf16.mxu0 0
        %2522 = vmatpush1.bf16.msra.mxu0 0
        %2523 = vmatprep.subr.bf16.mxu0 0
        %2524 = vmatpush1.bf16.msra.mxu0 0
        %2525 = vmatprep.subr.bf16.mxu0 0
        %2526 = vmatpush1.bf16.msra.mxu0 0
        %2527 = vmatprep.subr.bf16.mxu0 0
        %2528 = vmatpush1.bf16.msra.mxu0 0
        %2529 = vmatprep.subr.bf16.mxu0 0
        %2530 = vmatpush1.bf16.msra.mxu0 0
        %2531 = vmatprep.subr.bf16.mxu0 0
        %2532 = vmatpush1.bf16.msra.mxu0 0
        %2533 = vmatprep.mubr.bf16.mxu0 0
        %2534 = vmatmul.mubr.bf16.gmra.mrb[0].mxu0 %v2499
        %v2535 = vpop.f32.mrb[0].mxu0
        %v2536 = vadd.f32 0.0, %v2535
        %v2537 = vpop.f32.mrb[0].mxu0
        %v2538 = vpop.f32.mrb[0].mxu0
        %v2539 = vadd.f32 0.0, %v2538
        %v2540 = vpop.f32.mrb[0].mxu0
        %2541 = vdwg.mxu0
        %v2543 = vsel %vm2093, %v2276, 0
        %2545 = vmatprep.subr.bf16.mxu0 0
        %2546 = vmatpush1.bf16.msra.mxu0 %v1650
        %2547 = vmatprep.subr.bf16.mxu0 0
        %2548 = vmatpush1.bf16.msra.mxu0 0
        %2549 = vmatprep.subr.bf16.mxu0 0
        %2550 = vmatpush1.bf16.msra.mxu0 0
        %2551 = vmatprep.subr.bf16.mxu0 0
        %2552 = vmatpush1.bf16.msra.mxu0 0
        %2553 = vmatprep.subr.bf16.mxu0 0
        %2554 = vmatpush1.bf16.msra.mxu0 0
        %2555 = vmatprep.subr.bf16.mxu0 0
        %2556 = vmatpush1.bf16.msra.mxu0 0
        %2557 = vmatprep.subr.bf16.mxu0 0
        %2558 = vmatpush1.bf16.msra.mxu0 0
        %2559 = vmatprep.subr.bf16.mxu0 0
        %2560 = vmatpush1.bf16.msra.mxu0 0
        %2561 = vmatprep.subr.bf16.mxu0 0
        %2562 = vmatpush1.bf16.msra.mxu0 0
        %2563 = vmatprep.subr.bf16.mxu0 0
        %2564 = vmatpush1.bf16.msra.mxu0 0
        %2565 = vmatprep.subr.bf16.mxu0 0
        %2566 = vmatpush1.bf16.msra.mxu0 0
        %2567 = vmatprep.subr.bf16.mxu0 0
        %2568 = vmatpush1.bf16.msra.mxu0 0
        %2569 = vmatprep.subr.bf16.mxu0 0
        %2570 = vmatpush1.bf16.msra.mxu0 0
        %2571 = vmatprep.subr.bf16.mxu0 0
        %2572 = vmatpush1.bf16.msra.mxu0 0
        %2573 = vmatprep.subr.bf16.mxu0 0
        %2574 = vmatpush1.bf16.msra.mxu0 0
        %2575 = vmatprep.subr.bf16.mxu0 0
        %2576 = vmatpush1.bf16.msra.mxu0 0
        %2577 = vmatprep.mubr.bf16.mxu0 0
        %2578 = vmatmul.mubr.bf16.gmra.mrb[0].mxu0 %v2543
        %v2579 = vpop.f32.mrb[0].mxu0
        %v2580 = vadd.f32 0.0, %v2579
        %v2581 = vpop.f32.mrb[0].mxu0
        %v2582 = vpop.f32.mrb[0].mxu0
        %v2583 = vadd.f32 0.0, %v2582
        %v2584 = vpop.f32.mrb[0].mxu0
        %2585 = vdwg.mxu0
        %v2587 = vsel %vm2093, %v2277, 0
        %2589 = vmatprep.subr.bf16.mxu0 0
        %2590 = vmatpush1.bf16.msra.mxu0 %v1690
        %2591 = vmatprep.subr.bf16.mxu0 0
        %2592 = vmatpush1.bf16.msra.mxu0 0
        %2593 = vmatprep.subr.bf16.mxu0 0
        %2594 = vmatpush1.bf16.msra.mxu0 0
        %2595 = vmatprep.subr.bf16.mxu0 0
        %2596 = vmatpush1.bf16.msra.mxu0 0
        %2597 = vmatprep.subr.bf16.mxu0 0
        %2598 = vmatpush1.bf16.msra.mxu0 0
        %2599 = vmatprep.subr.bf16.mxu0 0
        %2600 = vmatpush1.bf16.msra.mxu0 0
        %2601 = vmatprep.subr.bf16.mxu0 0
        %2602 = vmatpush1.bf16.msra.mxu0 0
        %2603 = vmatprep.subr.bf16.mxu0 0
        %2604 = vmatpush1.bf16.msra.mxu0 0
        %2605 = vmatprep.subr.bf16.mxu0 0
        %2606 = vmatpush1.bf16.msra.mxu0 0
        %2607 = vmatprep.subr.bf16.mxu0 0
        %2608 = vmatpush1.bf16.msra.mxu0 0
        %2609 = vmatprep.subr.bf16.mxu0 0
        %2610 = vmatpush1.bf16.msra.mxu0 0
        %2611 = vmatprep.subr.bf16.mxu0 0
        %2612 = vmatpush1.bf16.msra.mxu0 0
        %2613 = vmatprep.subr.bf16.mxu0 0
        %2614 = vmatpush1.bf16.msra.mxu0 0
        %2615 = vmatprep.subr.bf16.mxu0 0
        %2616 = vmatpush1.bf16.msra.mxu0 0
        %2617 = vmatprep.subr.bf16.mxu0 0
        %2618 = vmatpush1.bf16.msra.mxu0 0
        %2619 = vmatprep.subr.bf16.mxu0 0
        %2620 = vmatpush1.bf16.msra.mxu0 0
        %2621 = vmatprep.mubr.bf16.mxu0 0
        %2622 = vmatmul.mubr.bf16.gmra.mrb[0].mxu0 %v2587
        %v2623 = vpop.f32.mrb[0].mxu0
        %v2624 = vadd.f32 0.0, %v2623
        %v2625 = vpop.f32.mrb[0].mxu0
        %v2626 = vpop.f32.mrb[0].mxu0
        %v2627 = vadd.f32 0.0, %v2626
        %v2628 = vpop.f32.mrb[0].mxu0
        %2629 = vdwg.mxu0
        %v2630 = vpack.c.bf16 %v2319, %v2316
        %v2631 = vpack.c.bf16 %v2363, %v2360
        %v2632 = vpack.c.bf16 %v2407, %v2404
        %v2633 = vpack.c.bf16 %v2451, %v2448
        %v2634 = vpack.c.bf16 %v2495, %v2492
        %v2635 = vpack.c.bf16 %v2539, %v2536
        %v2636 = vpack.c.bf16 %v2583, %v2580
        %v2637 = vpack.c.bf16 %v2627, %v2624
        %v2640 = vpack.i.b16 %v2632, %v2630
        %v2642 = vshrl.u32 %v2630, 16
        %v2643 = vshrl.u32 %v2632, 16
        %v2644 = vpack.i.b16 %v2643, %v2642
        %v2648 = vpack.i.b16 %v2636, %v2634
        %v2650 = vshrl.u32 %v2634, 16
        %v2651 = vshrl.u32 %v2636, 16
        %v2652 = vpack.i.b16 %v2651, %v2650
        %v2656 = vpack.i.b16 %v2633, %v2631
        %v2658 = vshrl.u32 %v2631, 16
        %v2659 = vshrl.u32 %v2633, 16
        %v2660 = vpack.i.b16 %v2659, %v2658
        %v2664 = vpack.i.b16 %v2637, %v2635
        %v2666 = vshrl.u32 %v2635, 16
        %v2667 = vshrl.u32 %v2637, 16
        %v2668 = vpack.i.b16 %v2667, %v2666
        %v2670 = vcombine.high %v2640, %v551
        %v2672 = vunpack.c.l.s4 1983009808
        %v2673 = vunpack.c.0.s8 %v2672
        %v2674 = vlaneseq
        %v2675 = vshrl.u32 %v2674, 7
        %v2676 = vsub.s32 %v2673, %v2675
        %v2677 = vrot.slane %v2640, %v2676
        %v2679 = vunpack.c.l.s4 1983009808
        %v2680 = vunpack.c.0.s8 %v2679
        %v2681 = vlaneseq
        %v2682 = vshrl.u32 %v2681, 7
        %v2683 = vsub.s32 %v2680, %v2682
        %v2684 = vrot.slane %v2670, %v2683
        %v2685 = vcombine.high %v2648, %v551
        %v2687 = vunpack.c.l.s4 1983009808
        %v2688 = vunpack.c.0.s8 %v2687
        %v2689 = vlaneseq
        %v2690 = vshrl.u32 %v2689, 7
        %v2691 = vsub.s32 %v2688, %v2690
        %v2692 = vrot.slane %v2648, %v2691
        %v2694 = vunpack.c.l.s4 1983009808
        %v2695 = vunpack.c.0.s8 %v2694
        %v2696 = vlaneseq
        %v2697 = vshrl.u32 %v2696, 7
        %v2698 = vsub.s32 %v2695, %v2697
        %v2699 = vrot.slane %v2685, %v2698
        %v2700 = vcombine.low %v2677, %v2692
        %v2701 = vcombine.high %v2677, %v2692
        %v2703 = vunpack.c.l.s4 1934713408
        %v2704 = vunpack.c.0.s8 %v2703
        %v2705 = vlaneseq
        %v2706 = vshrl.u32 %v2705, 7
        %v2707 = vsub.s32 %v2704, %v2706
        %v2708 = vrot.slane %v2700, %v2707
        %v2710 = vunpack.c.l.s4 1934713408
        %v2711 = vunpack.c.0.s8 %v2710
        %v2712 = vlaneseq
        %v2713 = vshrl.u32 %v2712, 7
        %v2714 = vsub.s32 %v2711, %v2713
        %v2715 = vrot.slane %v2701, %v2714
        %v2716 = vcombine.low %v2684, %v2699
        %v2717 = vcombine.high %v2684, %v2699
        %v2719 = vunpack.c.l.s4 1934713408
        %v2720 = vunpack.c.0.s8 %v2719
        %v2721 = vlaneseq
        %v2722 = vshrl.u32 %v2721, 7
        %v2723 = vsub.s32 %v2720, %v2722
        %v2724 = vrot.slane %v2716, %v2723
        %v2726 = vunpack.c.l.s4 1934713408
        %v2727 = vunpack.c.0.s8 %v2726
        %v2728 = vlaneseq
        %v2729 = vshrl.u32 %v2728, 7
        %v2730 = vsub.s32 %v2727, %v2729
        %v2731 = vrot.slane %v2717, %v2730
        %v2732 = vcombine.high %v2708, 0
        %v2733 = vcombine.high %v2715, 0
        %v2734 = vcombine.high %v2724, 0
        %v2735 = vcombine.high %v2731, 0
        %v2736 = vcombine.high %v2644, %v554
        %v2738 = vunpack.c.l.s4 1983009808
        %v2739 = vunpack.c.0.s8 %v2738
        %v2740 = vlaneseq
        %v2741 = vshrl.u32 %v2740, 7
        %v2742 = vsub.s32 %v2739, %v2741
        %v2743 = vrot.slane %v2644, %v2742
        %v2745 = vunpack.c.l.s4 1983009808
        %v2746 = vunpack.c.0.s8 %v2745
        %v2747 = vlaneseq
        %v2748 = vshrl.u32 %v2747, 7
        %v2749 = vsub.s32 %v2746, %v2748
        %v2750 = vrot.slane %v2736, %v2749
        %v2751 = vcombine.high %v2652, %v554
        %v2753 = vunpack.c.l.s4 1983009808
        %v2754 = vunpack.c.0.s8 %v2753
        %v2755 = vlaneseq
        %v2756 = vshrl.u32 %v2755, 7
        %v2757 = vsub.s32 %v2754, %v2756
        %v2758 = vrot.slane %v2652, %v2757
        %v2760 = vunpack.c.l.s4 1983009808
        %v2761 = vunpack.c.0.s8 %v2760
        %v2762 = vlaneseq
        %v2763 = vshrl.u32 %v2762, 7
        %v2764 = vsub.s32 %v2761, %v2763
        %v2765 = vrot.slane %v2751, %v2764
        %v2766 = vcombine.low %v2743, %v2758
        %v2767 = vcombine.high %v2743, %v2758
        %v2769 = vunpack.c.l.s4 1934713408
        %v2770 = vunpack.c.0.s8 %v2769
        %v2771 = vlaneseq
        %v2772 = vshrl.u32 %v2771, 7
        %v2773 = vsub.s32 %v2770, %v2772
        %v2774 = vrot.slane %v2766, %v2773
        %v2776 = vunpack.c.l.s4 1934713408
        %v2777 = vunpack.c.0.s8 %v2776
        %v2778 = vlaneseq
        %v2779 = vshrl.u32 %v2778, 7
        %v2780 = vsub.s32 %v2777, %v2779
        %v2781 = vrot.slane %v2767, %v2780
        %v2782 = vcombine.low %v2750, %v2765
        %v2783 = vcombine.high %v2750, %v2765
        %v2785 = vunpack.c.l.s4 1934713408
        %v2786 = vunpack.c.0.s8 %v2785
        %v2787 = vlaneseq
        %v2788 = vshrl.u32 %v2787, 7
        %v2789 = vsub.s32 %v2786, %v2788
        %v2790 = vrot.slane %v2782, %v2789
        %v2792 = vunpack.c.l.s4 1934713408
        %v2793 = vunpack.c.0.s8 %v2792
        %v2794 = vlaneseq
        %v2795 = vshrl.u32 %v2794, 7
        %v2796 = vsub.s32 %v2793, %v2795
        %v2797 = vrot.slane %v2783, %v2796
        %v2798 = vcombine.high %v2774, 0
        %v2799 = vcombine.high %v2781, 0
        %v2800 = vcombine.high %v2790, 0
        %v2801 = vcombine.high %v2797, 0
        %v2802 = vcombine.high %v2656, %v551
        %v2804 = vunpack.c.l.s4 1983009808
        %v2805 = vunpack.c.0.s8 %v2804
        %v2806 = vlaneseq
        %v2807 = vshrl.u32 %v2806, 7
        %v2808 = vsub.s32 %v2805, %v2807
        %v2809 = vrot.slane %v2656, %v2808
        %v2811 = vunpack.c.l.s4 1983009808
        %v2812 = vunpack.c.0.s8 %v2811
        %v2813 = vlaneseq
        %v2814 = vshrl.u32 %v2813, 7
        %v2815 = vsub.s32 %v2812, %v2814
        %v2816 = vrot.slane %v2802, %v2815
        %v2817 = vcombine.high %v2664, %v551
        %v2819 = vunpack.c.l.s4 1983009808
        %v2820 = vunpack.c.0.s8 %v2819
        %v2821 = vlaneseq
        %v2822 = vshrl.u32 %v2821, 7
        %v2823 = vsub.s32 %v2820, %v2822
        %v2824 = vrot.slane %v2664, %v2823
        %v2826 = vunpack.c.l.s4 1983009808
        %v2827 = vunpack.c.0.s8 %v2826
        %v2828 = vlaneseq
        %v2829 = vshrl.u32 %v2828, 7
        %v2830 = vsub.s32 %v2827, %v2829
        %v2831 = vrot.slane %v2817, %v2830
        %v2832 = vcombine.low %v2809, %v2824
        %v2833 = vcombine.high %v2809, %v2824
        %v2835 = vunpack.c.l.s4 1934713408
        %v2836 = vunpack.c.0.s8 %v2835
        %v2837 = vlaneseq
        %v2838 = vshrl.u32 %v2837, 7
        %v2839 = vsub.s32 %v2836, %v2838
        %v2840 = vrot.slane %v2832, %v2839
        %v2842 = vunpack.c.l.s4 1934713408
        %v2843 = vunpack.c.0.s8 %v2842
        %v2844 = vlaneseq
        %v2845 = vshrl.u32 %v2844, 7
        %v2846 = vsub.s32 %v2843, %v2845
        %v2847 = vrot.slane %v2833, %v2846
        %v2848 = vcombine.low %v2816, %v2831
        %v2849 = vcombine.high %v2816, %v2831
        %v2851 = vunpack.c.l.s4 1934713408
        %v2852 = vunpack.c.0.s8 %v2851
        %v2853 = vlaneseq
        %v2854 = vshrl.u32 %v2853, 7
        %v2855 = vsub.s32 %v2852, %v2854
        %v2856 = vrot.slane %v2848, %v2855
        %v2858 = vunpack.c.l.s4 1934713408
        %v2859 = vunpack.c.0.s8 %v2858
        %v2860 = vlaneseq
        %v2861 = vshrl.u32 %v2860, 7
        %v2862 = vsub.s32 %v2859, %v2861
        %v2863 = vrot.slane %v2849, %v2862
        %v2864 = vcombine.high %v2840, 0
        %v2865 = vcombine.high %v2847, 0
        %v2866 = vcombine.high %v2856, 0
        %v2867 = vcombine.high %v2863, 0
        %v2868 = vcombine.high %v2660, %v554
        %v2870 = vunpack.c.l.s4 1983009808
        %v2871 = vunpack.c.0.s8 %v2870
        %v2872 = vlaneseq
        %v2873 = vshrl.u32 %v2872, 7
        %v2874 = vsub.s32 %v2871, %v2873
        %v2875 = vrot.slane %v2660, %v2874
        %v2877 = vunpack.c.l.s4 1983009808
        %v2878 = vunpack.c.0.s8 %v2877
        %v2879 = vlaneseq
        %v2880 = vshrl.u32 %v2879, 7
        %v2881 = vsub.s32 %v2878, %v2880
        %v2882 = vrot.slane %v2868, %v2881
        %v2883 = vcombine.high %v2668, %v554
        %v2885 = vunpack.c.l.s4 1983009808
        %v2886 = vunpack.c.0.s8 %v2885
        %v2887 = vlaneseq
        %v2888 = vshrl.u32 %v2887, 7
        %v2889 = vsub.s32 %v2886, %v2888
        %v2890 = vrot.slane %v2668, %v2889
        %v2892 = vunpack.c.l.s4 1983009808
        %v2893 = vunpack.c.0.s8 %v2892
        %v2894 = vlaneseq
        %v2895 = vshrl.u32 %v2894, 7
        %v2896 = vsub.s32 %v2893, %v2895
        %v2897 = vrot.slane %v2883, %v2896
        %v2898 = vcombine.low %v2875, %v2890
        %v2899 = vcombine.high %v2875, %v2890
        %v2901 = vunpack.c.l.s4 1934713408
        %v2902 = vunpack.c.0.s8 %v2901
        %v2903 = vlaneseq
        %v2904 = vshrl.u32 %v2903, 7
        %v2905 = vsub.s32 %v2902, %v2904
        %v2906 = vrot.slane %v2898, %v2905
        %v2908 = vunpack.c.l.s4 1934713408
        %v2909 = vunpack.c.0.s8 %v2908
        %v2910 = vlaneseq
        %v2911 = vshrl.u32 %v2910, 7
        %v2912 = vsub.s32 %v2909, %v2911
        %v2913 = vrot.slane %v2899, %v2912
        %v2914 = vcombine.low %v2882, %v2897
        %v2915 = vcombine.high %v2882, %v2897
        %v2917 = vunpack.c.l.s4 1934713408
        %v2918 = vunpack.c.0.s8 %v2917
        %v2919 = vlaneseq
        %v2920 = vshrl.u32 %v2919, 7
        %v2921 = vsub.s32 %v2918, %v2920
        %v2922 = vrot.slane %v2914, %v2921
        %v2924 = vunpack.c.l.s4 1934713408
        %v2925 = vunpack.c.0.s8 %v2924
        %v2926 = vlaneseq
        %v2927 = vshrl.u32 %v2926, 7
        %v2928 = vsub.s32 %v2925, %v2927
        %v2929 = vrot.slane %v2915, %v2928
        %v2930 = vcombine.high %v2906, 0
        %v2931 = vcombine.high %v2913, 0
        %v2932 = vcombine.high %v2922, 0
        %v2933 = vcombine.high %v2929, 0
        %v2934 = vcombine.low %v2708, %v2715
        %v2936 = vunpack.c.l.s4 1983009808
        %v2937 = vunpack.c.0.s8 %v2936
        %v2938 = vlaneseq
        %v2939 = vshrl.u32 %v2938, 7
        %v2940 = vsub.s32 %v2937, %v2939
        %v2941 = vrot.slane %v2934, %v2940
        %v2942 = vcombine.low %v2732, %v2733
        %v2944 = vunpack.c.l.s4 1983009808
        %v2945 = vunpack.c.0.s8 %v2944
        %v2946 = vlaneseq
        %v2947 = vshrl.u32 %v2946, 7
        %v2948 = vsub.s32 %v2945, %v2947
        %v2949 = vrot.slane %v2942, %v2948
        %v2950 = vcombine.low %v2724, %v2731
        %v2952 = vunpack.c.l.s4 1983009808
        %v2953 = vunpack.c.0.s8 %v2952
        %v2954 = vlaneseq
        %v2955 = vshrl.u32 %v2954, 7
        %v2956 = vsub.s32 %v2953, %v2955
        %v2957 = vrot.slane %v2950, %v2956
        %v2958 = vcombine.low %v2734, %v2735
        %v2960 = vunpack.c.l.s4 1983009808
        %v2961 = vunpack.c.0.s8 %v2960
        %v2962 = vlaneseq
        %v2963 = vshrl.u32 %v2962, 7
        %v2964 = vsub.s32 %v2961, %v2963
        %v2965 = vrot.slane %v2958, %v2964
        %v2966 = vcombine.low %v2941, %v2949
        %v2968 = vunpack.c.l.s4 1934713408
        %v2969 = vunpack.c.0.s8 %v2968
        %v2970 = vlaneseq
        %v2971 = vshrl.u32 %v2970, 7
        %v2972 = vsub.s32 %v2969, %v2971
        %v2973 = vrot.slane %v2966, %v2972
        %v2974 = vcombine.low %v2957, %v2965
        %v2976 = vunpack.c.l.s4 1934713408
        %v2977 = vunpack.c.0.s8 %v2976
        %v2978 = vlaneseq
        %v2979 = vshrl.u32 %v2978, 7
        %v2980 = vsub.s32 %v2977, %v2979
        %v2981 = vrot.slane %v2974, %v2980
        %v2982 = vcombine.low %v2973, %v2981
        %v2983 = vcombine.high %v2973, %v2981
        %v2984 = vcombine.low %v2774, %v2781
        %v2986 = vunpack.c.l.s4 1983009808
        %v2987 = vunpack.c.0.s8 %v2986
        %v2988 = vlaneseq
        %v2989 = vshrl.u32 %v2988, 7
        %v2990 = vsub.s32 %v2987, %v2989
        %v2991 = vrot.slane %v2984, %v2990
        %v2992 = vcombine.low %v2798, %v2799
        %v2994 = vunpack.c.l.s4 1983009808
        %v2995 = vunpack.c.0.s8 %v2994
        %v2996 = vlaneseq
        %v2997 = vshrl.u32 %v2996, 7
        %v2998 = vsub.s32 %v2995, %v2997
        %v2999 = vrot.slane %v2992, %v2998
        %v3000 = vcombine.low %v2790, %v2797
        %v3002 = vunpack.c.l.s4 1983009808
        %v3003 = vunpack.c.0.s8 %v3002
        %v3004 = vlaneseq
        %v3005 = vshrl.u32 %v3004, 7
        %v3006 = vsub.s32 %v3003, %v3005
        %v3007 = vrot.slane %v3000, %v3006
        %v3008 = vcombine.low %v2800, %v2801
        %v3010 = vunpack.c.l.s4 1983009808
        %v3011 = vunpack.c.0.s8 %v3010
        %v3012 = vlaneseq
        %v3013 = vshrl.u32 %v3012, 7
        %v3014 = vsub.s32 %v3011, %v3013
        %v3015 = vrot.slane %v3008, %v3014
        %v3016 = vcombine.low %v2991, %v2999
        %v3018 = vunpack.c.l.s4 1934713408
        %v3019 = vunpack.c.0.s8 %v3018
        %v3020 = vlaneseq
        %v3021 = vshrl.u32 %v3020, 7
        %v3022 = vsub.s32 %v3019, %v3021
        %v3023 = vrot.slane %v3016, %v3022
        %v3024 = vcombine.low %v3007, %v3015
        %v3026 = vunpack.c.l.s4 1934713408
        %v3027 = vunpack.c.0.s8 %v3026
        %v3028 = vlaneseq
        %v3029 = vshrl.u32 %v3028, 7
        %v3030 = vsub.s32 %v3027, %v3029
        %v3031 = vrot.slane %v3024, %v3030
        %v3032 = vcombine.low %v3023, %v3031
        %v3033 = vcombine.high %v3023, %v3031
        %v3034 = vcombine.low %v2840, %v2847
        %v3036 = vunpack.c.l.s4 1983009808
        %v3037 = vunpack.c.0.s8 %v3036
        %v3038 = vlaneseq
        %v3039 = vshrl.u32 %v3038, 7
        %v3040 = vsub.s32 %v3037, %v3039
        %v3041 = vrot.slane %v3034, %v3040
        %v3042 = vcombine.low %v2864, %v2865
        %v3044 = vunpack.c.l.s4 1983009808
        %v3045 = vunpack.c.0.s8 %v3044
        %v3046 = vlaneseq
        %v3047 = vshrl.u32 %v3046, 7
        %v3048 = vsub.s32 %v3045, %v3047
        %v3049 = vrot.slane %v3042, %v3048
        %v3050 = vcombine.low %v2856, %v2863
        %v3052 = vunpack.c.l.s4 1983009808
        %v3053 = vunpack.c.0.s8 %v3052
        %v3054 = vlaneseq
        %v3055 = vshrl.u32 %v3054, 7
        %v3056 = vsub.s32 %v3053, %v3055
        %v3057 = vrot.slane %v3050, %v3056
        %v3058 = vcombine.low %v2866, %v2867
        %v3060 = vunpack.c.l.s4 1983009808
        %v3061 = vunpack.c.0.s8 %v3060
        %v3062 = vlaneseq
        %v3063 = vshrl.u32 %v3062, 7
        %v3064 = vsub.s32 %v3061, %v3063
        %v3065 = vrot.slane %v3058, %v3064
        %v3066 = vcombine.low %v3041, %v3049
        %v3068 = vunpack.c.l.s4 1934713408
        %v3069 = vunpack.c.0.s8 %v3068
        %v3070 = vlaneseq
        %v3071 = vshrl.u32 %v3070, 7
        %v3072 = vsub.s32 %v3069, %v3071
        %v3073 = vrot.slane %v3066, %v3072
        %v3074 = vcombine.low %v3057, %v3065
        %v3076 = vunpack.c.l.s4 1934713408
        %v3077 = vunpack.c.0.s8 %v3076
        %v3078 = vlaneseq
        %v3079 = vshrl.u32 %v3078, 7
        %v3080 = vsub.s32 %v3077, %v3079
        %v3081 = vrot.slane %v3074, %v3080
        %v3082 = vcombine.low %v3073, %v3081
        %v3083 = vcombine.high %v3073, %v3081
        %v3084 = vcombine.low %v2906, %v2913
        %v3086 = vunpack.c.l.s4 1983009808
        %v3087 = vunpack.c.0.s8 %v3086
        %v3088 = vlaneseq
        %v3089 = vshrl.u32 %v3088, 7
        %v3090 = vsub.s32 %v3087, %v3089
        %v3091 = vrot.slane %v3084, %v3090
        %v3092 = vcombine.low %v2930, %v2931
        %v3094 = vunpack.c.l.s4 1983009808
        %v3095 = vunpack.c.0.s8 %v3094
        %v3096 = vlaneseq
        %v3097 = vshrl.u32 %v3096, 7
        %v3098 = vsub.s32 %v3095, %v3097
        %v3099 = vrot.slane %v3092, %v3098
        %v3100 = vcombine.low %v2922, %v2929
        %v3102 = vunpack.c.l.s4 1983009808
        %v3103 = vunpack.c.0.s8 %v3102
        %v3104 = vlaneseq
        %v3105 = vshrl.u32 %v3104, 7
        %v3106 = vsub.s32 %v3103, %v3105
        %v3107 = vrot.slane %v3100, %v3106
        %v3108 = vcombine.low %v2932, %v2933
        %v3110 = vunpack.c.l.s4 1983009808
        %v3111 = vunpack.c.0.s8 %v3110
        %v3112 = vlaneseq
        %v3113 = vshrl.u32 %v3112, 7
        %v3114 = vsub.s32 %v3111, %v3113
        %v3115 = vrot.slane %v3108, %v3114
        %v3116 = vcombine.low %v3091, %v3099
        %v3118 = vunpack.c.l.s4 1934713408
        %v3119 = vunpack.c.0.s8 %v3118
        %v3120 = vlaneseq
        %v3121 = vshrl.u32 %v3120, 7
        %v3122 = vsub.s32 %v3119, %v3121
        %v3123 = vrot.slane %v3116, %v3122
        %v3124 = vcombine.low %v3107, %v3115
        %v3126 = vunpack.c.l.s4 1934713408
        %v3127 = vunpack.c.0.s8 %v3126
        %v3128 = vlaneseq
        %v3129 = vshrl.u32 %v3128, 7
        %v3130 = vsub.s32 %v3127, %v3129
        %v3131 = vrot.slane %v3124, %v3130
        %v3132 = vcombine.low %v3123, %v3131
        %v3133 = vcombine.high %v3123, %v3131
        %v3136 = vpack.i.b16 %v3032, %v2982
        %v3137 = vshrl.u32 %v2982, 16
        %v3138 = vshrl.u32 %v3032, 16
        %v3139 = vpack.i.b16 %v3138, %v3137
        %v3142 = vpack.i.b16 %v3033, %v2983
        %v3143 = vshrl.u32 %v2983, 16
        %v3144 = vshrl.u32 %v3033, 16
        %v3145 = vpack.i.b16 %v3144, %v3143
        %v3148 = vpack.i.b16 %v3132, %v3082
        %v3149 = vshrl.u32 %v3082, 16
        %v3150 = vshrl.u32 %v3132, 16
        %v3151 = vpack.i.b16 %v3150, %v3149
        %v3154 = vpack.i.b16 %v3133, %v3083
        %v3155 = vshrl.u32 %v3083, 16
        %v3156 = vshrl.u32 %v3133, 16
        %v3157 = vpack.i.b16 %v3156, %v3155
        %3158 = vrot.lane.b32.xlu0 %v3139, 8
        %v3159 = vpop.permute.xlu0 %3158
        %3160 = vrot.lane.b32.xlu0 %v3151, 8
        %v3161 = vpop.permute.xlu0 %3160
        %3162 = vrot.lane.b32.xlu0 %v3142, 16
        %v3163 = vpop.permute.xlu0 %3162
        %3164 = vrot.lane.b32.xlu0 %v3154, 16
        %v3165 = vpop.permute.xlu0 %3164
        %3166 = vrot.lane.b32.xlu0 %v3145, 24
        %v3167 = vpop.permute.xlu0 %3166
        %3168 = vrot.lane.b32.xlu0 %v3157, 24
        %v3169 = vpop.permute.xlu0 %3168
        %v3172 = vsel %vm1692, %v3136, %v3159
        %v3175 = vsel %vm1692, %v3148, %v3161
        %v3177 = vsel %vm2093, %v3172, %v3163
        %v3179 = vsel %vm2093, %v3175, %v3165
        %vm3180 = vcmask 195584
        %v3182 = vsel %vm3180, %v3177, %v3167
        %v3184 = vsel %vm3180, %v3179, %v3169
        %v3185 = vld [vmem:[#allocation10] sm:$0xf]
        %v3186 = vld [vmem:[#allocation10 + $0x4] sm:$0xf]
        %v3187 = vld [vmem:[#allocation10 + $0x8] sm:$0xf]
        %v3188 = vld [vmem:[#allocation10 + $0xc] sm:$0xf]
        %v3189 = vld [vmem:[#allocation11] sm:$0x1]
        %v3191 = vlaneseq
        %v3192 = vshrl.u32 %v3191, 7
        %v3193 = vsub.s32 0, %v3192
        %v3194 = vrot.slane %v3189, %v3193
        %v3200 = vunpack.c.l.b16 %v3185
        %v3201 = vunpack.c.l.b16 %v3186
        %v3202 = vunpack.c.l.b16 %v3187
        %v3203 = vunpack.c.l.b16 %v3188
        %v3204 = vpack.c.b16 %v3201, %v3200
        %v3205 = vpack.c.b16 %v3203, %v3202
        %v3208 = vsel %vm398, %v3182, 0
        %v3210 = vsel %vm398, %v3184, 0
        %3212 = vmatprep.subr.bf16.mxu0 0
        %3213 = vmatpush1.bf16.msra.mxu0 %v3204
        %3214 = vmatprep.subr.bf16.mxu0 0
        %3215 = vmatpush1.bf16.msra.mxu0 %v3205
        %3216 = vmatprep.subr.bf16.mxu0 0
        %3217 = vmatpush1.bf16.msra.mxu0 0
        %3218 = vmatprep.subr.bf16.mxu0 0
        %3219 = vmatpush1.bf16.msra.mxu0 0
        %3220 = vmatprep.subr.bf16.mxu0 0
        %3221 = vmatpush1.bf16.msra.mxu0 0
        %3222 = vmatprep.subr.bf16.mxu0 0
        %3223 = vmatpush1.bf16.msra.mxu0 0
        %3224 = vmatprep.subr.bf16.mxu0 0
        %3225 = vmatpush1.bf16.msra.mxu0 0
        %3226 = vmatprep.subr.bf16.mxu0 0
        %3227 = vmatpush1.bf16.msra.mxu0 0
        %3228 = vmatprep.subr.bf16.mxu0 0
        %3229 = vmatpush1.bf16.msra.mxu0 0
        %3230 = vmatprep.subr.bf16.mxu0 0
        %3231 = vmatpush1.bf16.msra.mxu0 0
        %3232 = vmatprep.subr.bf16.mxu0 0
        %3233 = vmatpush1.bf16.msra.mxu0 0
        %3234 = vmatprep.subr.bf16.mxu0 0
        %3235 = vmatpush1.bf16.msra.mxu0 0
        %3236 = vmatprep.subr.bf16.mxu0 0
        %3237 = vmatpush1.bf16.msra.mxu0 0
        %3238 = vmatprep.subr.bf16.mxu0 0
        %3239 = vmatpush1.bf16.msra.mxu0 0
        %3240 = vmatprep.subr.bf16.mxu0 0
        %3241 = vmatpush1.bf16.msra.mxu0 0
        %3242 = vmatprep.subr.bf16.mxu0 0
        %3243 = vmatpush1.bf16.msra.mxu0 0
        %3244 = vmatprep.mubr.bf16.mxu0 0
        %3245 = vmatmul.mubr.bf16.gmra.mrb[0].mxu0 %v3208
        %v3246 = vpop.f32.mrb[0].mxu0
        %v3247 = vadd.f32 %v3194, %v3246
        %v3248 = vpop.f32.mrb[0].mxu0
        %v3249 = vpop.f32.mrb[0].mxu0
        %v3250 = vadd.f32 %v3194, %v3249
        %v3251 = vpop.f32.mrb[0].mxu0
        %3252 = vmatprep.mubr.bf16.mxu0 0
        %3253 = vmatmul.mubr.bf16.gmra.mrb[0].mxu0 %v3210
        %v3254 = vpop.f32.mrb[0].mxu0
        %v3255 = vadd.f32 %v3194, %v3254
        %v3256 = vpop.f32.mrb[0].mxu0
        %v3257 = vpop.f32.mrb[0].mxu0
        %v3258 = vadd.f32 %v3194, %v3257
        %v3259 = vpop.f32.mrb[0].mxu0
        %3260 = vdwg.mxu0
        %3261 = vst [vmem:[%s357] sm:$0xff] %v3247
        %3262 = vst [vmem:[%s357 + $0x8] sm:$0xff] %v3250
        %3263 = vst [vmem:[%s357 + $0x10] sm:$0xff] %v3255
        %3264 = vst [vmem:[%s357 + $0x18] sm:$0xff] %v3258
        %s3265 = sand.u32 %s181, 1
        %s3266 = scalar_lea.sflag [#allocation4], %s3265
        %s3267 = sand.u32 %s181, 1
        %s3268 = smul.addr %s3267, 32
        %s3269 = scalar_lea.vmem [#allocation13], %s3268
        // Predicated region
        $region69: #{tpu_custom_call.1} parent=43 // pred_check
          %p3270 = pneg %p191
        $region70: #{tpu_custom_call.1} parent=43 // pred_check_branch
          %3272 = sbr.rel (%p3270) target = $region72
        $region71: #{tpu_custom_call.1} parent=43 // pred_region
          %s3273 = smul.u32 2, %s31
          %s3275 = ssub.s32 512, 512
          %3276 = vsyncadd %s3266, %s3275
          %s3277 = smul.addr %s3273, 2
          %s3278 = smul.addr %s30, 8
          %s3279 = sadd.s32 %s3277, %s3278
          %s3280 = smul.addr %s3279, 128
          %s3281 = scalar_lea.hbm %s6, %s3280
          %s3282 = sshll.u32 %s3269, 4
          %s3283 = int_to_ptr.vmem [resolvable:$true] %s3282
          %3288 = dma.vmem_to_hbm [thread:$0]  %s3283, 512, %s3281, %s3266, 128, 128, 8
        $region72: #{tpu_custom_call.1} parent=43 // pred_fallthru
          _
      $region44: #{tpu_custom_call.1} parent=5 // pred_fallthru
        _
      %p3289 = scmp.le.s32.totalorder 2, %s21
      // Predicated region
      $region73: #{tpu_custom_call.1} parent=5 // pred_check
        %p3290 = pneg %p3289
      $region74: #{tpu_custom_call.1} parent=5 // pred_check_branch
        %3292 = sbr.rel (%p3290) target = $region76
      $region75: #{tpu_custom_call.1} parent=5 // pred_region
        %s3293 = ssub.s32 %s21, 2
        // Predicated region
        $region77: #{tpu_custom_call.1} parent=75 // pred_check
          %p3294 = pneg %p197
        $region78: #{tpu_custom_call.1} parent=75 // pred_check_branch
          %3296 = sbr.rel (%p3294) target = $region80
        $region79: #{tpu_custom_call.1} parent=75 // pred_region
          %s3297 = sand.u32 %s182, 1
          %s3298 = scalar_lea.sflag [#allocation4], %s3297
          %s3299 = sand.u32 %s182, 1
          %s3300 = smul.addr %s3299, 32
          %s3301 = scalar_lea.vmem [#allocation13], %s3300
          %3302 = dma.done %s3298, 512
        $region80: #{tpu_custom_call.1} parent=75 // pred_fallthru
          _
      $region76: #{tpu_custom_call.1} parent=5 // pred_fallthru
        _
    $region6: #{tpu_custom_call.1} parent=1 // loop_footer
      %s25 = sadd.s32 1, %s21
    $region7: #{tpu_custom_call.1} parent=1 // loop_footer_branch
      %20 = sbr.rel target = $region3
    $region8: #{tpu_custom_call.1} parent=1 // loop_exit
      _
    %3303 = vsyncpa [#allocation3], 1
    %s3304 = scalar_lea.sflag [#allocation3], 1
    %3305 = vsyncpa %s3304, 1
    %3306 = vsyncpa [#allocation6], 1
    %3307 = vsyncpa [#allocation9], 1
    %3308 = vsyncpa [#allocation12], 1
    %3309 = vsyncpa [#allocation4], 1
    %s3310 = scalar_lea.sflag [#allocation4], 1
    %3311 = vsyncpa %s3310, 1

</llo_original>
